<compile_context>
chip_gen: v5e
topology: v5e:2x2
jax: 0.10.0
libtpu: 0.0.40
codegen_flags: <defaults>
</compile_context>

<pallas_src>
import jax
import jax.numpy as jnp
from jax.experimental import pallas as pl
from jax.experimental.pallas import tpu as pltpu


def _round_up(x: int, m: int) -> int:
    return ((x + m - 1) // m) * m


def _cdiv(a: int, b: int) -> int:
    return (a + b - 1) // b


def _pad_to(a, target_shape):
    pads = [(0, t - s) for s, t in zip(a.shape, target_shape)]
    if any(p[1] for p in pads):
        return jnp.pad(a, pads)
    return a


def _vmem_cap_bytes() -> int:
    """Per-core VMEM budget: hardware capacity minus ~25% compiler headroom."""
    try:
        cap = int(pltpu.get_tpu_info().vmem_capacity_bytes)
    except Exception:
        cap = 64 << 20  # conservative (v7x-sized) fallback
    return max(16 << 20, (cap * 3) // 4)


def prepare_openchem_mlp_params(w1, b1, w2, b2):
    """One-time parameter prep (do NOT call per forward step).

    Casts the matmul operands to bf16 and zero-pads only the lane dims
    (hidden H and output O) up to multiples of 128.  Zero padding is exact:
    padded hidden columns are relu(0 + 0) = 0 and padded W2 rows/cols are 0.
    """
    D_in, H = w1.shape
    O = w2.shape[-1]
    H_p = _round_up(H, 128)
    O_p = _round_up(O, 128)
    w1_p = _pad_to(jnp.asarray(w1, jnp.bfloat16), (D_in, H_p))
    w2_p = _pad_to(jnp.asarray(w2, jnp.bfloat16), (H_p, O_p))
    b1_p = _pad_to(jnp.asarray(b1, jnp.float32).reshape(1, -1), (1, H_p))
    b2_p = _pad_to(jnp.asarray(b2, jnp.float32).reshape(1, -1), (1, O_p))
    return dict(w1=w1_p, b1=b1_p, w2=w2_p, b2=b2_p,
                d_in=D_in, hidden=H, out=O, hidden_p=H_p, out_p=O_p)


def _mlp_kernel(x_ref, w1_ref, b1_ref, w2_ref, b2_ref, o_ref, acc_ref):
    """One (batch-tile, hidden-tile) grid step of relu(x@W1+b1)@W2 + b2."""
    h_idx = pl.program_id(1)

    @pl.when(h_idx == 0)
    def _init():
        acc_ref[...] = jnp.zeros_like(acc_ref)

    # Cast the streamed f32 x tile to bf16 in-kernel (VPU work hidden under
    # the MXU; avoids a separate wrapper cast pass over x in HBM).
    x = x_ref[...].astype(jnp.bfloat16)
    hid = jnp.dot(x, w1_ref[...], preferred_element_type=jnp.float32)
    # Bias + ReLU in f32 (portable to v5e, which has no bf16 VPU), then a
    # single bf16 cast for the second MXU matmul.
    hid = jnp.maximum(hid + b1_ref[...], 0.0).astype(jnp.bfloat16)
    acc_ref[...] += jnp.dot(hid, w2_ref[...], preferred_element_type=jnp.float32)

    @pl.when(h_idx == pl.num_programs(1) - 1)
    def _finalize():
        o_ref[...] = (acc_ref[...] + b2_ref[...]).astype(o_ref.dtype)


def openchem_mlp_forward(x, params, *, block_b: int = 512, hidden_block=None):
    """Fused MLP head forward: relu(x @ W1 + b1) @ W2 + b2 (f32 result).

    `params` must come from prepare_openchem_mlp_params (bf16 + lane-padded
    weights prepared once and reused across calls).
    """
    x = jnp.asarray(x)
    B, D_in = x.shape
    assert D_in == params["d_in"], "feature dim mismatch with prepared params"
    H, O = params["hidden"], params["out"]
    H_p, O_p = params["hidden_p"], params["out_p"]
    w1_p, b1_p, w2_p, b2_p = params["w1"], params["b1"], params["w2"], params["b2"]
    xi = x.dtype.itemsize

    cap = _vmem_cap_bytes()

    # ---- batch tile: multiple of 8 sublanes, >=2 grid steps when possible so
    # the "parallel" axis can shard across both v7x TensorCores.
    TB = min(block_b, _round_up(B, 8))
    if B >= 16:
        TB = min(TB, _round_up(_cdiv(B, 2), 8))
    TB = max(8, _round_up(TB, 8))

    def est_vmem(tb, th, wbuf):
        return int(
            2 * tb * D_in * xi                      # streamed x tiles (orig dtype)
            + 2 * tb * O_p * 4                      # streamed f32 output tiles
            + tb * O_p * 4                          # f32 accumulator scratch
            + wbuf * (D_in * th + th * O_p) * 2     # bf16 weight tiles
            + wbuf * 8 * th * 4 + 8 * O_p * 4       # f32 bias tiles (8-sublane pad)
            + tb * th * 6                           # f32+bf16 hidden intermediates
            + (2 << 20))                            # compiler headroom

    # ---- hidden tile: multiple of 128 dividing H_p; H_p (resident) if it fits.
    if hidden_block is not None:
        TH = max(128, (min(hidden_block, H_p) // 128) * 128)
    else:
        TH = H_p
    while H_p % TH:
        TH -= 128
    while est_vmem(TB, TH, 1 if TH == H_p else 2) > cap and TH > 128:
        TH -= 128
        while H_p % TH:
            TH -= 128
    while est_vmem(TB, TH, 1 if TH == H_p else 2) > cap and TB > 8:
        TB = max(8, _round_up(TB // 2, 8))

    num_b = _cdiv(B, TB)
    num_h = H_p // TH
    resident = (num_h == 1)

    # Cost estimate from un-padded logical dims (keeps XLA's scheduler honest).
    cost = pl.CostEstimate(
        flops=2 * B * (D_in * H + H * O),
        transcendentals=0,
        bytes_accessed=int(B * D_in * xi + w1_p.size * 2 + w2_p.size * 2
                           + (b1_p.size + b2_p.size) * 4 + B * O_p * 4),
    )

    def build_call(single_buffer_resident: bool):
        res_mode = pl.Buffered(1) if single_buffer_resident else None
        w_mode = res_mode if resident else None

        def spec(shape, imap, mode=None):
            if mode is None:
                return pl.BlockSpec(shape, imap)
            return pl.BlockSpec(shape, imap, pipeline_mode=mode)

        wbuf = 1 if (resident and single_buffer_resident) else 2
        vmem_limit = int(min(cap, max(32 << 20, est_vmem(TB, TH, wbuf))))

        in_specs = [
            spec((TB, D_in), lambda b, h: (b, 0)),            # streamed x tiles
            spec((D_in, TH), lambda b, h: (0, h), w_mode),    # W1 tile / resident
            spec((1, TH),    lambda b, h: (0, h), w_mode),    # b1 tile / resident
            spec((TH, O_p),  lambda b, h: (h, 0), w_mode),    # W2 tile / resident
            spec((1, O_p),   lambda b, h: (0, 0), res_mode),  # b2 (always resident)
        ]
        return pl.pallas_call(
            _mlp_kernel,
            out_shape=jax.ShapeDtypeStruct((B, O_p), jnp.float32),
            grid=(num_b, num_h),
            in_specs=in_specs,
            out_specs=pl.BlockSpec((TB, O_p), lambda b, h: (b, 0)),
            scratch_shapes=[pltpu.VMEM((TB, O_p), jnp.float32)],
            compiler_params=pltpu.CompilerParams(
                dimension_semantics=("parallel", "arbitrary"),
                vmem_limit_bytes=vmem_limit,
            ),
            cost_estimate=cost,
        )

    try:
        out_padded = build_call(True)(x, w1_p, b1_p, w2_p, b2_p)
    except Exception:
        # Fallback if pl.Buffered(1) is rejected on this jax/libtpu version.
        out_padded = build_call(False)(x, w1_p, b1_p, w2_p, b2_p)

    # Only padded output columns need trimming (batch is not padded).
    return out_padded[:, :O]


def reference_forward(x, w1, b1, w2, b2):
    """f32 reference with the same bf16 operand quantization as the kernel."""
    xb = x.astype(jnp.bfloat16)
    w1b = w1.astype(jnp.bfloat16)
    w2b = w2.astype(jnp.bfloat16)
    h = jnp.dot(xb, w1b, preferred_element_type=jnp.float32) + b1.reshape(1, -1)
    h = jnp.maximum(h, 0.0).astype(jnp.bfloat16)
    return jnp.dot(h, w2b, preferred_element_type=jnp.float32) + b2.reshape(1, -1)


if __name__ == "__main__":
    # Small shapes consistent with an OpenChem feature->label model.
    # B=64 exercises a 2-step pipelined batch grid; HID=256 lets the second
    # call exercise the H-tiled accumulator path (hidden_block=128 -> 2 steps).
    B, D_IN, HID, N_OUT = 64, 32, 256, 8

    key = jax.random.PRNGKey(0)
    k_x, k_w1, k_b1, k_w2, k_b2 = jax.random.split(key, 5)

    x = jax.random.normal(k_x, (B, D_IN), dtype=jnp.float32)
    # Deterministic parameter init (no checkpoint load).
    w1 = jax.random.normal(k_w1, (D_IN, HID), dtype=jnp.float32) * 0.1
    b1 = jax.random.normal(k_b1, (1, HID), dtype=jnp.float32) * 0.01
    w2 = jax.random.normal(k_w2, (HID, N_OUT), dtype=jnp.float32) * 0.1
    b2 = jax.random.normal(k_b2, (1, N_OUT), dtype=jnp.float32) * 0.01

    # One-time weight prep (bf16 cast + lane-dim padding), reused across calls.
    params = prepare_openchem_mlp_params(w1, b1, w2, b2)

    # Path 1: resident weights, 2-step batch grid.
    out = jax.block_until_ready(openchem_mlp_forward(x, params))
    # Path 2: hidden-tiled accumulator path (2 "arbitrary" H steps).
    out_tiled = jax.block_until_ready(
        openchem_mlp_forward(x, params, hidden_block=128))

    ref = reference_forward(x, w1, b1, w2, b2)
    ref_f32 = jnp.maximum(x @ w1 + b1, 0.0) @ w2 + b2

    assert out.shape == (B, N_OUT)
    assert out_tiled.shape == (B, N_OUT)
    # Exact-path checks against the bf16-quantized reference.
    assert jnp.allclose(out, ref, atol=1e-4, rtol=1e-4), "mismatch vs bf16 ref"
    assert jnp.allclose(out_tiled, ref, atol=1e-4, rtol=1e-4), \
        "H-tiled path mismatch vs bf16 ref"
    # Sanity check against the full-f32 reference (bf16 operand rounding).
    assert jnp.allclose(out, ref_f32, atol=5e-2, rtol=5e-2), "mismatch vs f32 ref"

    print("KERNEL_OK")
</pallas_src>

<mosaic_0001>
module attributes {stable_mosaic.version = 11 : i64} {
  func.func @_mlp_kernel(%arg0: i32, %arg1: i32, %arg2: memref<32x32xf32, #tpu.memory_space<vmem>>, %arg3: memref<32x256xbf16, #tpu.memory_space<vmem>>, %arg4: memref<1x256xf32, #tpu.memory_space<vmem>>, %arg5: memref<256x128xbf16, #tpu.memory_space<vmem>>, %arg6: memref<1x128xf32, #tpu.memory_space<vmem>>, %arg7: memref<32x128xf32, #tpu.memory_space<vmem>>, %arg8: memref<32x128xf32, #tpu.memory_space<vmem>>) attributes {dimension_semantics = [#tpu.dimension_semantics<parallel>, #tpu.dimension_semantics<arbitrary>], iteration_bounds = array<i64: 2, 1>, scalar_prefetch = 0 : i64, scratch_operands = 1 : i64, tpu.core_type = #tpu.core_type<tc>, window_params = [{transform_indices = @transform_0, window_bounds = array<i64: 32, 32>}, {pipeline_mode = #tpu.pipeline_mode<synchronous>, transform_indices = @transform_1, window_bounds = array<i64: 32, 256>}, {pipeline_mode = #tpu.pipeline_mode<synchronous>, transform_indices = @transform_2, window_bounds = array<i64: 1, 256>}, {pipeline_mode = #tpu.pipeline_mode<synchronous>, transform_indices = @transform_3, window_bounds = array<i64: 256, 128>}, {pipeline_mode = #tpu.pipeline_mode<synchronous>, transform_indices = @transform_4, window_bounds = array<i64: 1, 128>}, {transform_indices = @transform_5, window_bounds = array<i64: 32, 128>}]} {
    %c0_i32 = arith.constant 0 : i32
    %0 = arith.cmpi eq, %arg1, %c0_i32 : i32
    %1 = arith.extui %0 : i1 to i32
    %c0_i32_0 = arith.constant 0 : i32
    %2 = arith.cmpi ne, %1, %c0_i32_0 : i32
    scf.if %2 {
      %cst_16 = arith.constant 0.000000e+00 : f32
      %21 = vector.broadcast %cst_16 : f32 to vector<32x128xf32>
      %c0_17 = arith.constant 0 : index
      %c0_18 = arith.constant 0 : index
      %22 = vector.load %arg8[%c0_17, %c0_18] : memref<32x128xf32, #tpu.memory_space<vmem>>, vector<32x128xf32>
      tpu.vector_store %arg8[%c0_17, %c0_18], %21 {strides = array<i32>} : memref<32x128xf32, #tpu.memory_space<vmem>>, vector<32x128xf32>,
    } else {
    }
    %c0 = arith.constant 0 : index
    %c0_1 = arith.constant 0 : index
    %3 = vector.load %arg2[%c0, %c0_1] : memref<32x32xf32, #tpu.memory_space<vmem>>, vector<32x32xf32>
    %4 = arith.truncf %3 : vector<32x32xf32> to vector<32x32xbf16>
    %c0_2 = arith.constant 0 : index
    %c0_3 = arith.constant 0 : index
    %5 = vector.load %arg3[%c0_2, %c0_3] : memref<32x256xbf16, #tpu.memory_space<vmem>>, vector<32x256xbf16>
    %cst = arith.constant dense<0.000000e+00> : vector<32x256xf32>
    %6 = tpu.matmul %4, %5, %cst {dimension_numbers = #tpu.dot_dimension_numbers<[1], [0], [0], [1], [0, 0, 1, 1], [], []>} : vector<32x32xbf16>, vector<32x256xbf16>, vector<32x256xf32> -> vector<32x256xf32>
    %c0_4 = arith.constant 0 : index
    %c0_5 = arith.constant 0 : index
    %7 = vector.load %arg4[%c0_4, %c0_5] : memref<1x256xf32, #tpu.memory_space<vmem>>, vector<1x256xf32>
    %8 = vector.broadcast %7 : vector<1x256xf32> to vector<32x256xf32>
    %9 = arith.addf %6, %8 : vector<32x256xf32>
    %cst_6 = arith.constant 0.000000e+00 : f32
    %10 = vector.broadcast %cst_6 : f32 to vector<32x256xf32>
    %11 = arith.maximumf %9, %10 : vector<32x256xf32>
    %12 = arith.truncf %11 : vector<32x256xf32> to vector<32x256xbf16>
    %c0_7 = arith.constant 0 : index
    %c0_8 = arith.constant 0 : index
    %13 = vector.load %arg8[%c0_7, %c0_8] : memref<32x128xf32, #tpu.memory_space<vmem>>, vector<32x128xf32>
    %c0_9 = arith.constant 0 : index
    %c0_10 = arith.constant 0 : index
    %14 = vector.load %arg5[%c0_9, %c0_10] : memref<256x128xbf16, #tpu.memory_space<vmem>>, vector<256x128xbf16>
    %cst_11 = arith.constant dense<0.000000e+00> : vector<32x128xf32>
    %15 = tpu.matmul %12, %14, %cst_11 {dimension_numbers = #tpu.dot_dimension_numbers<[1], [0], [0], [1], [0, 0, 1, 1], [], []>} : vector<32x256xbf16>, vector<256x128xbf16>, vector<32x128xf32> -> vector<32x128xf32>
    %16 = arith.addf %13, %15 : vector<32x128xf32>
    %c0_12 = arith.constant 0 : index
    %c0_13 = arith.constant 0 : index
    %17 = vector.load %arg8[%c0_12, %c0_13] : memref<32x128xf32, #tpu.memory_space<vmem>>, vector<32x128xf32>
    tpu.vector_store %arg8[%c0_12, %c0_13], %16 {strides = array<i32>} : memref<32x128xf32, #tpu.memory_space<vmem>>, vector<32x128xf32>,
    %c0_i32_14 = arith.constant 0 : i32
    %18 = arith.cmpi eq, %arg1, %c0_i32_14 : i32
    %19 = arith.extui %18 : i1 to i32
    %c0_i32_15 = arith.constant 0 : i32
    %20 = arith.cmpi ne, %19, %c0_i32_15 : i32
    scf.if %20 {
      %c0_16 = arith.constant 0 : index
      %c0_17 = arith.constant 0 : index
      %21 = vector.load %arg8[%c0_16, %c0_17] : memref<32x128xf32, #tpu.memory_space<vmem>>, vector<32x128xf32>
      %c0_18 = arith.constant 0 : index
      %c0_19 = arith.constant 0 : index
      %22 = vector.load %arg6[%c0_18, %c0_19] : memref<1x128xf32, #tpu.memory_space<vmem>>, vector<1x128xf32>
      %23 = vector.broadcast %22 : vector<1x128xf32> to vector<32x128xf32>
      %24 = arith.addf %21, %23 : vector<32x128xf32>
      %c0_20 = arith.constant 0 : index
      %c0_21 = arith.constant 0 : index
      %25 = vector.load %arg7[%c0_20, %c0_21] : memref<32x128xf32, #tpu.memory_space<vmem>>, vector<32x128xf32>
      tpu.vector_store %arg7[%c0_20, %c0_21], %24 {strides = array<i32>} : memref<32x128xf32, #tpu.memory_space<vmem>>, vector<32x128xf32>,
    } else {
    }
    return
  }
  func.func @transform_0(%arg0: i32, %arg1: i32) -> (i32, i32) {
    %c0_i32 = arith.constant 0 : i32
    %c0_i32_0 = arith.constant 0 : i32
    return %arg0, %c0_i32 : i32, i32
  }
  func.func @transform_1(%arg0: i32, %arg1: i32) -> (i32, i32) {
    %c0_i32 = arith.constant 0 : i32
    %c0_i32_0 = arith.constant 0 : i32
    return %c0_i32, %arg1 : i32, i32
  }
  func.func @transform_2(%arg0: i32, %arg1: i32) -> (i32, i32) {
    %c0_i32 = arith.constant 0 : i32
    %c0_i32_0 = arith.constant 0 : i32
    return %c0_i32, %arg1 : i32, i32
  }
  func.func @transform_3(%arg0: i32, %arg1: i32) -> (i32, i32) {
    %c0_i32 = arith.constant 0 : i32
    %c0_i32_0 = arith.constant 0 : i32
    return %arg1, %c0_i32 : i32, i32
  }
  func.func @transform_4(%arg0: i32, %arg1: i32) -> (i32, i32) {
    %c0_i32 = arith.constant 0 : i32
    %c0_i32_0 = arith.constant 0 : i32
    %c0_i32_1 = arith.constant 0 : i32
    return %c0_i32, %c0_i32_0 : i32, i32
  }
  func.func @transform_5(%arg0: i32, %arg1: i32) -> (i32, i32) {
    %c0_i32 = arith.constant 0 : i32
    %c0_i32_0 = arith.constant 0 : i32
    return %arg0, %c0_i32 : i32, i32
  }
}

module attributes {stable_mosaic.version = 11 : i64} {
  func.func @_mlp_kernel(%arg0: i32, %arg1: i32, %arg2: memref<32x32xf32, #tpu.memory_space<vmem>>, %arg3: memref<32x256xbf16, #tpu.memory_space<vmem>>, %arg4: memref<1x256xf32, #tpu.memory_space<vmem>>, %arg5: memref<256x128xbf16, #tpu.memory_space<vmem>>, %arg6: memref<1x128xf32, #tpu.memory_space<vmem>>, %arg7: memref<32x128xf32, #tpu.memory_space<vmem>>, %arg8: memref<32x128xf32, #tpu.memory_space<vmem>>) attributes {dimension_semantics = [#tpu.dimension_semantics<parallel>, #tpu.dimension_semantics<arbitrary>], iteration_bounds = array<i64: 2, 1>, scalar_prefetch = 0 : i64, scratch_operands = 1 : i64, tpu.core_type = #tpu.core_type<tc>, window_params = [{transform_indices = @transform_0, window_bounds = array<i64: 32, 32>}, {transform_indices = @transform_1, window_bounds = array<i64: 32, 256>}, {transform_indices = @transform_2, window_bounds = array<i64: 1, 256>}, {transform_indices = @transform_3, window_bounds = array<i64: 256, 128>}, {pipeline_mode = #tpu.pipeline_mode<synchronous>, transform_indices = @transform_4, window_bounds = array<i64: 1, 128>}, {transform_indices = @transform_5, window_bounds = array<i64: 32, 128>}]} {
    %c0_i32 = arith.constant 0 : i32
    %0 = arith.cmpi eq, %arg1, %c0_i32 : i32
    %1 = arith.extui %0 : i1 to i32
    %c0_i32_0 = arith.constant 0 : i32
    %2 = arith.cmpi ne, %1, %c0_i32_0 : i32
    scf.if %2 {
      %cst_16 = arith.constant 0.000000e+00 : f32
      %21 = vector.broadcast %cst_16 : f32 to vector<32x128xf32>
      %c0_17 = arith.constant 0 : index
      %c0_18 = arith.constant 0 : index
      %22 = vector.load %arg8[%c0_17, %c0_18] : memref<32x128xf32, #tpu.memory_space<vmem>>, vector<32x128xf32>
      tpu.vector_store %arg8[%c0_17, %c0_18], %21 {strides = array<i32>} : memref<32x128xf32, #tpu.memory_space<vmem>>, vector<32x128xf32>,
    } else {
    }
    %c0 = arith.constant 0 : index
    %c0_1 = arith.constant 0 : index
    %3 = vector.load %arg2[%c0, %c0_1] : memref<32x32xf32, #tpu.memory_space<vmem>>, vector<32x32xf32>
    %4 = arith.truncf %3 : vector<32x32xf32> to vector<32x32xbf16>
    %c0_2 = arith.constant 0 : index
    %c0_3 = arith.constant 0 : index
    %5 = vector.load %arg3[%c0_2, %c0_3] : memref<32x256xbf16, #tpu.memory_space<vmem>>, vector<32x256xbf16>
    %cst = arith.constant dense<0.000000e+00> : vector<32x256xf32>
    %6 = tpu.matmul %4, %5, %cst {dimension_numbers = #tpu.dot_dimension_numbers<[1], [0], [0], [1], [0, 0, 1, 1], [], []>} : vector<32x32xbf16>, vector<32x256xbf16>, vector<32x256xf32> -> vector<32x256xf32>
    %c0_4 = arith.constant 0 : index
    %c0_5 = arith.constant 0 : index
    %7 = vector.load %arg4[%c0_4, %c0_5] : memref<1x256xf32, #tpu.memory_space<vmem>>, vector<1x256xf32>
    %8 = vector.broadcast %7 : vector<1x256xf32> to vector<32x256xf32>
    %9 = arith.addf %6, %8 : vector<32x256xf32>
    %cst_6 = arith.constant 0.000000e+00 : f32
    %10 = vector.broadcast %cst_6 : f32 to vector<32x256xf32>
    %11 = arith.maximumf %9, %10 : vector<32x256xf32>
    %12 = arith.truncf %11 : vector<32x256xf32> to vector<32x256xbf16>
    %c0_7 = arith.constant 0 : index
    %c0_8 = arith.constant 0 : index
    %13 = vector.load %arg8[%c0_7, %c0_8] : memref<32x128xf32, #tpu.memory_space<vmem>>, vector<32x128xf32>
    %c0_9 = arith.constant 0 : index
    %c0_10 = arith.constant 0 : index
    %14 = vector.load %arg5[%c0_9, %c0_10] : memref<256x128xbf16, #tpu.memory_space<vmem>>, vector<256x128xbf16>
    %cst_11 = arith.constant dense<0.000000e+00> : vector<32x128xf32>
    %15 = tpu.matmul %12, %14, %cst_11 {dimension_numbers = #tpu.dot_dimension_numbers<[1], [0], [0], [1], [0, 0, 1, 1], [], []>} : vector<32x256xbf16>, vector<256x128xbf16>, vector<32x128xf32> -> vector<32x128xf32>
    %16 = arith.addf %13, %15 : vector<32x128xf32>
    %c0_12 = arith.constant 0 : index
    %c0_13 = arith.constant 0 : index
    %17 = vector.load %arg8[%c0_12, %c0_13] : memref<32x128xf32, #tpu.memory_space<vmem>>, vector<32x128xf32>
    tpu.vector_store %arg8[%c0_12, %c0_13], %16 {strides = array<i32>} : memref<32x128xf32, #tpu.memory_space<vmem>>, vector<32x128xf32>,
    %c0_i32_14 = arith.constant 0 : i32
    %18 = arith.cmpi eq, %arg1, %c0_i32_14 : i32
    %19 = arith.extui %18 : i1 to i32
    %c0_i32_15 = arith.constant 0 : i32
    %20 = arith.cmpi ne, %19, %c0_i32_15 : i32
    scf.if %20 {
      %c0_16 = arith.constant 0 : index
      %c0_17 = arith.constant 0 : index
      %21 = vector.load %arg8[%c0_16, %c0_17] : memref<32x128xf32, #tpu.memory_space<vmem>>, vector<32x128xf32>
      %c0_18 = arith.constant 0 : index
      %c0_19 = arith.constant 0 : index
      %22 = vector.load %arg6[%c0_18, %c0_19] : memref<1x128xf32, #tpu.memory_space<vmem>>, vector<1x128xf32>
      %23 = vector.broadcast %22 : vector<1x128xf32> to vector<32x128xf32>
      %24 = arith.addf %21, %23 : vector<32x128xf32>
      %c0_20 = arith.constant 0 : index
      %c0_21 = arith.constant 0 : index
      %25 = vector.load %arg7[%c0_20, %c0_21] : memref<32x128xf32, #tpu.memory_space<vmem>>, vector<32x128xf32>
      tpu.vector_store %arg7[%c0_20, %c0_21], %24 {strides = array<i32>} : memref<32x128xf32, #tpu.memory_space<vmem>>, vector<32x128xf32>,
    } else {
    }
    return
  }
  func.func @transform_0(%arg0: i32, %arg1: i32) -> (i32, i32) {
    %c0_i32 = arith.constant 0 : i32
    %c0_i32_0 = arith.constant 0 : i32
    return %arg0, %c0_i32 : i32, i32
  }
  func.func @transform_1(%arg0: i32, %arg1: i32) -> (i32, i32) {
    %c0_i32 = arith.constant 0 : i32
    %c0_i32_0 = arith.constant 0 : i32
    return %c0_i32, %arg1 : i32, i32
  }
  func.func @transform_2(%arg0: i32, %arg1: i32) -> (i32, i32) {
    %c0_i32 = arith.constant 0 : i32
    %c0_i32_0 = arith.constant 0 : i32
    return %c0_i32, %arg1 : i32, i32
  }
  func.func @transform_3(%arg0: i32, %arg1: i32) -> (i32, i32) {
    %c0_i32 = arith.constant 0 : i32
    %c0_i32_0 = arith.constant 0 : i32
    return %arg1, %c0_i32 : i32, i32
  }
  func.func @transform_4(%arg0: i32, %arg1: i32) -> (i32, i32) {
    %c0_i32 = arith.constant 0 : i32
    %c0_i32_0 = arith.constant 0 : i32
    %c0_i32_1 = arith.constant 0 : i32
    return %c0_i32, %c0_i32_0 : i32, i32
  }
  func.func @transform_5(%arg0: i32, %arg1: i32) -> (i32, i32) {
    %c0_i32 = arith.constant 0 : i32
    %c0_i32_0 = arith.constant 0 : i32
    return %arg0, %c0_i32 : i32, i32
  }
}

</mosaic_0001>

<llo_original>
// kernel: tpu_custom_call.1
$region0: #{tpu_custom_call.1}
  #allocation0 [shape = 'u32[]', space=smem, size = 0x4, offset = 0x4, fixed_abs, tag = 'smem constant byte address 0x4 - core index']
  #allocation1 [shape = 'u32[72,128]{1,0:T(1,128)}', space=vmem, size = 0x9000, scoped, tag = 'internal scratch']
  #allocation2 [shape = 'f32[32,128]{1,0:T(8,128)}', space=vmem, size = 0x4000, scoped, tag = 'scratch operand']
  %s0 = inlined_call_operand.vmem [shape: f32[64,32], index: 0, kind: input, shape index: {}]
  %s1 = inlined_call_operand.vmem [shape: bf16[32,256], index: 1, kind: input, shape index: {}]
  %s2 = inlined_call_operand.vmem [shape: f32[1,256], index: 2, kind: input, shape index: {}]
  %s3 = inlined_call_operand.hbm [shape: bf16[256,128], index: 3, kind: input, shape index: {}]
  %s4 = inlined_call_operand.vmem [shape: f32[1,128], index: 4, kind: input, shape index: {}]
  %s5 = inlined_call_operand.hbm [shape: f32[64,128], index: 5, kind: output, shape index: {}]
  %s6 = sld [smem:[#allocation0]]
  $region65: #{tpu_custom_call.1} parent=0
    _
  %s8 = ssub.s32 1, %s6
  %s9 = scalar_select 0, %s8, %s6
  $region1: #{tpu_custom_call.1} parent=0
    #allocation3 [shape = 'u8[65536]{0}', space=vmem, size = 0x10000, scoped, tag = 'input window, operand 3, single buffered']
    #allocation4 [shape = 's32[2]{0}', space=sflag, size = 0x8, scoped, tag = 'scoped memory for tpu_custom_call.1']
    #allocation5 [shape = 's32[2]{0}', space=sflag, size = 0x8, scoped, tag = 'scoped memory for tpu_custom_call.1']
    #allocation6 [shape = 'u8[32768]{0}', space=vmem, size = 0x8000, scoped, tag = 'output window, operand 0']
    %10 = vsyncpa [#allocation4], 0
    %11 = vsyncpa [#allocation5], 0
    %s12 = scalar_lea.sflag [#allocation5], 1
    %13 = vsyncpa %s12, 0
    loop: start=0, step=1, limit=4
    $region2: #{tpu_custom_call.1} parent=1 // loop_pre_header
      _
    $region3: #{tpu_custom_call.1} parent=1 // loop_header
      %s15 = sphi 0, %s19
      %p16 = scmp.ge.s32.totalorder %s15, 4
      %s22 = sphi 0, %s34
      %s23 = sphi 0, %s30
      %s24 = sphi 0, %s22
      %s25 = sphi 0, %s23
      %s26 = sphi 0, %s24
      %s27 = sphi 0, %s25
      %s37 = sphi 0, %s39
      %s40 = sphi 0, %s37
      %s41 = sphi 0, %s40
      %s57 = sphi 0, %s41
      %s63 = sphi 0, %s65
      %s66 = sphi 0, %s63
      %s67 = sphi 0, %s66
      %s83 = sphi 0, %s67
      %s89 = sphi 0, %s91
      %s92 = sphi 0, %s89
      %s93 = sphi 0, %s92
      %s109 = sphi 0, %s93
      %s115 = sphi 0, %s117
      %s118 = sphi 0, %s115
      %s119 = sphi 0, %s118
      %s135 = sphi 0, %s119
      %s139 = sphi 0, %s139
      %s141 = sphi 0, %s139
      %s142 = sphi 0, %s141
      %s156 = sphi 0, %s142
      %s162 = sphi 0, %s164
      %s165 = sphi 0, %s162
      %s166 = sphi 0, %s165
      %s182 = sphi 0, %s166
    $region4: #{tpu_custom_call.1} parent=1 // loop_header_branch
      %18 = sbr.rel (%p16) target = $region8
    $region5: #{tpu_custom_call.1} parent=1 // loop_body
      %s20 = ssub.s32 %s15, 1
      %s21 = ssub.s32 %s15, 2
      %s28 = sadd.s32 1, %s23
      %p29 = scmp.ge.s32.totalorder %s28, 1
      %s30 = scalar_select %p29, 0, %s28
      %s31 = sadd.s32 1, %s22
      %s32 = scalar_select %p29, %s31, %s22
      %p33 = scmp.ge.s32.totalorder %s32, 2
      %s34 = scalar_select %p33, 0, %s32
      %s35 = ssub.s32 %s22, %s34
      %p36 = scmp.eq.s32.totalorder %s35, 0
      %s38 = sadd.s32 %s37, 1
      %s39 = scalar_select %p36, %s37, %s38
      %p42 = pneg %p36
      %p43 = scmp.eq.s32.totalorder %s15, 1
      %p44 = por %p42, %p43
      %p45 = scmp.ne.s32.totalorder %s37, %s40
      %p46 = scmp.eq.s32.totalorder %s15, 0
      %p47 = por %p45, %p46
      %p48 = scmp.ne.s32.totalorder %s37, %s40
      %p49 = scmp.eq.s32.totalorder %s20, 1
      %p50 = por %p48, %p49
      %p51 = scmp.ne.s32.totalorder %s40, %s41
      %p52 = scmp.eq.s32.totalorder %s20, 0
      %p53 = por %p51, %p52
      %p54 = scmp.ne.s32.totalorder %s40, %s41
      %p55 = scmp.eq.s32.totalorder %s21, 1
      %p56 = por %p54, %p55
      %p58 = scmp.ne.s32.totalorder %s41, %s57
      %p59 = scmp.eq.s32.totalorder %s21, 0
      %p60 = por %p58, %p59
      %s61 = ssub.s32 %s23, %s30
      %p62 = scmp.eq.s32.totalorder %s61, 0
      %s64 = sadd.s32 %s63, 1
      %s65 = scalar_select %p62, %s63, %s64
      %p68 = pneg %p62
      %p69 = scmp.eq.s32.totalorder %s15, 1
      %p70 = por %p68, %p69
      %p71 = scmp.ne.s32.totalorder %s63, %s66
      %p72 = scmp.eq.s32.totalorder %s15, 0
      %p73 = por %p71, %p72
      %p74 = scmp.ne.s32.totalorder %s63, %s66
      %p75 = scmp.eq.s32.totalorder %s20, 1
      %p76 = por %p74, %p75
      %p77 = scmp.ne.s32.totalorder %s66, %s67
      %p78 = scmp.eq.s32.totalorder %s20, 0
      %p79 = por %p77, %p78
      %p80 = scmp.ne.s32.totalorder %s66, %s67
      %p81 = scmp.eq.s32.totalorder %s21, 1
      %p82 = por %p80, %p81
      %p84 = scmp.ne.s32.totalorder %s67, %s83
      %p85 = scmp.eq.s32.totalorder %s21, 0
      %p86 = por %p84, %p85
      %s87 = ssub.s32 %s23, %s30
      %p88 = scmp.eq.s32.totalorder %s87, 0
      %s90 = sadd.s32 %s89, 1
      %s91 = scalar_select %p88, %s89, %s90
      %p94 = pneg %p88
      %p95 = scmp.eq.s32.totalorder %s15, 1
      %p96 = por %p94, %p95
      %p97 = scmp.ne.s32.totalorder %s89, %s92
      %p98 = scmp.eq.s32.totalorder %s15, 0
      %p99 = por %p97, %p98
      %p100 = scmp.ne.s32.totalorder %s89, %s92
      %p101 = scmp.eq.s32.totalorder %s20, 1
      %p102 = por %p100, %p101
      %p103 = scmp.ne.s32.totalorder %s92, %s93
      %p104 = scmp.eq.s32.totalorder %s20, 0
      %p105 = por %p103, %p104
      %p106 = scmp.ne.s32.totalorder %s92, %s93
      %p107 = scmp.eq.s32.totalorder %s21, 1
      %p108 = por %p106, %p107
      %p110 = scmp.ne.s32.totalorder %s93, %s109
      %p111 = scmp.eq.s32.totalorder %s21, 0
      %p112 = por %p110, %p111
      %s113 = ssub.s32 %s23, %s30
      %p114 = scmp.eq.s32.totalorder %s113, 0
      %s116 = sadd.s32 %s115, 1
      %s117 = scalar_select %p114, %s115, %s116
      %p120 = pneg %p114
      %p121 = scmp.eq.s32.totalorder %s15, 1
      %p122 = por %p120, %p121
      %p123 = scmp.ne.s32.totalorder %s115, %s118
      %p124 = scmp.eq.s32.totalorder %s15, 0
      %p125 = por %p123, %p124
      %p126 = scmp.ne.s32.totalorder %s115, %s118
      %p127 = scmp.eq.s32.totalorder %s20, 1
      %p128 = por %p126, %p127
      %p129 = scmp.ne.s32.totalorder %s118, %s119
      %p130 = scmp.eq.s32.totalorder %s20, 0
      %p131 = por %p129, %p130
      %p132 = scmp.ne.s32.totalorder %s118, %s119
      %p133 = scmp.eq.s32.totalorder %s21, 1
      %p134 = por %p132, %p133
      %p136 = scmp.ne.s32.totalorder %s119, %s135
      %p137 = scmp.eq.s32.totalorder %s21, 0
      %p138 = por %p136, %p137
      %s140 = sadd.s32 %s139, 1
      %p143 = scmp.eq.s32.totalorder %s15, 1
      %p144 = scmp.ne.s32.totalorder %s139, %s141
      %p145 = scmp.eq.s32.totalorder %s15, 0
      %p146 = por %p144, %p145
      %p147 = scmp.ne.s32.totalorder %s139, %s141
      %p148 = scmp.eq.s32.totalorder %s20, 1
      %p149 = por %p147, %p148
      %p150 = scmp.ne.s32.totalorder %s141, %s142
      %p151 = scmp.eq.s32.totalorder %s20, 0
      %p152 = por %p150, %p151
      %p153 = scmp.ne.s32.totalorder %s141, %s142
      %p154 = scmp.eq.s32.totalorder %s21, 1
      %p155 = por %p153, %p154
      %p157 = scmp.ne.s32.totalorder %s142, %s156
      %p158 = scmp.eq.s32.totalorder %s21, 0
      %p159 = por %p157, %p158
      %s160 = ssub.s32 %s22, %s34
      %p161 = scmp.eq.s32.totalorder %s160, 0
      %s163 = sadd.s32 %s162, 1
      %s164 = scalar_select %p161, %s162, %s163
      %p167 = pneg %p161
      %p168 = scmp.eq.s32.totalorder %s15, 1
      %p169 = por %p167, %p168
      %p170 = scmp.ne.s32.totalorder %s162, %s165
      %p171 = scmp.eq.s32.totalorder %s15, 0
      %p172 = por %p170, %p171
      %p173 = scmp.ne.s32.totalorder %s162, %s165
      %p174 = scmp.eq.s32.totalorder %s20, 1
      %p175 = por %p173, %p174
      %p176 = scmp.ne.s32.totalorder %s165, %s166
      %p177 = scmp.eq.s32.totalorder %s20, 0
      %p178 = por %p176, %p177
      %p179 = scmp.ne.s32.totalorder %s165, %s166
      %p180 = scmp.eq.s32.totalorder %s21, 1
      %p181 = por %p179, %p180
      %p183 = scmp.ne.s32.totalorder %s166, %s182
      %p184 = scmp.eq.s32.totalorder %s21, 0
      %p185 = por %p183, %p184
      %p186 = scmp.le.s32.totalorder 1, %s15
      %p187 = scmp.lt.s32.totalorder %s15, 3
      %p188 = pnand %p186, %p187
      %p189 = pneg %p188
      // Predicated region
      $region9: #{tpu_custom_call.1} parent=5 // pred_check
        _
      $region10: #{tpu_custom_call.1} parent=5 // pred_check_branch
        %191 = sbr.rel (%p188) target = $region12
      $region11: #{tpu_custom_call.1} parent=5 // pred_region
        %s192 = ssub.s32 %s15, 1
        // Predicated region
        $region13: #{tpu_custom_call.1} parent=11 // pred_check
          %p193 = pneg %p79
        $region14: #{tpu_custom_call.1} parent=11 // pred_check_branch
          %195 = sbr.rel (%p193) target = $region16
        $region15: #{tpu_custom_call.1} parent=11 // pred_region
          %s196 = smul.u32 2, %s25
          %p197 = scmp.lt.s32.totalorder %s196, 1
          %s198 = scalar_select %p197, %s196, 1
          %s199 = smul.addr %s198, 4
          %s200 = scalar_lea.vmem %s1, %s199
          %s201 = smul.u32 2, %s25
        $region16: #{tpu_custom_call.1} parent=11 // pred_fallthru
          _
        // Predicated region
        $region17: #{tpu_custom_call.1} parent=11 // pred_check
          %p202 = pneg %p105
        $region18: #{tpu_custom_call.1} parent=11 // pred_check_branch
          %204 = sbr.rel (%p202) target = $region20
        $region19: #{tpu_custom_call.1} parent=11 // pred_region
          %s205 = smul.u32 2, %s25
          %p206 = scmp.lt.s32.totalorder %s205, 1
          %s207 = scalar_select %p206, %s205, 1
          %s208 = scalar_lea.vmem %s2, %s207
          %s209 = smul.u32 2, %s25
        $region20: #{tpu_custom_call.1} parent=11 // pred_fallthru
          _
        // Predicated region
        $region21: #{tpu_custom_call.1} parent=11 // pred_check
          %p210 = pneg %p131
        $region22: #{tpu_custom_call.1} parent=11 // pred_check_branch
          %212 = sbr.rel (%p210) target = $region24
        $region23: #{tpu_custom_call.1} parent=11 // pred_region
          %s213 = smul.u32 32, %s25
          %215 = vsyncadd [#allocation4], 0
          %s216 = smul.addr %s213, 4
          %s217 = scalar_lea.hbm %s3, %s216
          %s218 = sshll.u32 %s217, 4
          %s219 = int_to_ptr.hbm [resolvable:$true] %s218
          %s220 = sshll.u32 [#allocation3], 4
          %s221 = int_to_ptr.vmem [resolvable:$true] %s220
          %226 = dma.hbm_to_vmem [thread:$0]  %s219, 2048, %s221, [#allocation4], 64, 64, 4
        $region24: #{tpu_custom_call.1} parent=11 // pred_fallthru
          _
        // Predicated region
        $region25: #{tpu_custom_call.1} parent=11 // pred_check
          %p227 = pneg %p152
        $region26: #{tpu_custom_call.1} parent=11 // pred_check_branch
          %229 = sbr.rel (%p227) target = $region28
        $region27: #{tpu_custom_call.1} parent=11 // pred_region
          _
        $region28: #{tpu_custom_call.1} parent=11 // pred_fallthru
          _
      $region12: #{tpu_custom_call.1} parent=5 // pred_fallthru
        _
      %p230 = scmp.lt.s32.totalorder %s15, 2
      // Predicated region
      $region29: #{tpu_custom_call.1} parent=5 // pred_check
        %p231 = pneg %p230
      $region30: #{tpu_custom_call.1} parent=5 // pred_check_branch
        %233 = sbr.rel (%p231) target = $region32
      $region31: #{tpu_custom_call.1} parent=5 // pred_region
        // Predicated region
        $region33: #{tpu_custom_call.1} parent=31 // pred_check
          %p234 = pneg %p47
        $region34: #{tpu_custom_call.1} parent=31 // pred_check_branch
          %236 = sbr.rel (%p234) target = $region36
        $region35: #{tpu_custom_call.1} parent=31 // pred_region
          %s237 = smul.u32 4, %s22
          %p238 = scmp.lt.s32.totalorder %s237, 7
          %s239 = scalar_select %p238, %s237, 7
          %s240 = smul.addr %s239, 8
          %s241 = scalar_lea.vmem %s0, %s240
          %s242 = smul.u32 4, %s22
        $region36: #{tpu_custom_call.1} parent=31 // pred_fallthru
          _
      $region32: #{tpu_custom_call.1} parent=5 // pred_fallthru
        _
      %p243 = scmp.le.s32.totalorder 1, %s15
      %p244 = scmp.lt.s32.totalorder %s15, 3
      %p245 = pnand %p243, %p244
      %p246 = pneg %p245
      // Predicated region
      $region37: #{tpu_custom_call.1} parent=5 // pred_check
        _
      $region38: #{tpu_custom_call.1} parent=5 // pred_check_branch
        %248 = sbr.rel (%p245) target = $region40
      $region39: #{tpu_custom_call.1} parent=5 // pred_region
        %s249 = ssub.s32 %s15, 1
        // Predicated region
        $region41: #{tpu_custom_call.1} parent=39 // pred_check
          %p250 = pneg %p131
        $region42: #{tpu_custom_call.1} parent=39 // pred_check_branch
          %252 = sbr.rel (%p250) target = $region44
        $region43: #{tpu_custom_call.1} parent=39 // pred_region
          %254 = dma.done [#allocation4], 2048
        $region44: #{tpu_custom_call.1} parent=39 // pred_fallthru
          _
        %s255 = smul.u32 4, %s24
        %p256 = scmp.lt.s32.totalorder %s255, 7
        %s257 = scalar_select %p256, %s255, 7
        %s258 = smul.addr %s257, 8
        %s259 = scalar_lea.vmem %s0, %s258
        %p260 = pneg %p53
        %p261 = pneg %p50
        %s262 = smul.u32 2, %s25
        %p263 = scmp.lt.s32.totalorder %s262, 1
        %s264 = scalar_select %p263, %s262, 1
        %s265 = smul.addr %s264, 4
        %s266 = scalar_lea.vmem %s1, %s265
        %p267 = pneg %p79
        %p268 = pneg %p76
        %s269 = smul.u32 2, %s25
        %p270 = scmp.lt.s32.totalorder %s269, 1
        %s271 = scalar_select %p270, %s269, 1
        %s272 = scalar_lea.vmem %s2, %s271
        %p273 = pneg %p105
        %p274 = pneg %p102
        %p275 = pneg %p131
        %p276 = pneg %p128
        %p277 = pneg %p152
        %p278 = pneg %p149
        %p279 = pneg %p178
        %p280 = pneg %p175
        %s281 = sand.u32 %s165, 1
        %s282 = scalar_lea.sflag [#allocation5], %s281
        %s283 = sand.u32 %s165, 1
        %s284 = smul.addr %s283, 32
        %s285 = scalar_lea.vmem [#allocation6], %s284
        %s286 = smul.u32 4, %s24
        %p287 = scmp.lt.s32.totalorder %s286, 7
        %s288 = scalar_select %p287, %s286, 7
        %s289 = smul.addr %s288, 8
        %s290 = scalar_lea.vmem %s0, %s289
        %s291 = smul.u32 4, %s24
        %s292 = smul.u32 2, %s25
        %p293 = scmp.lt.s32.totalorder %s292, 1
        %s294 = scalar_select %p293, %s292, 1
        %s295 = smul.addr %s294, 4
        %s296 = scalar_lea.vmem %s1, %s295
        %s297 = smul.u32 2, %s25
        %s298 = smul.u32 2, %s25
        %p299 = scmp.lt.s32.totalorder %s298, 1
        %s300 = scalar_select %p299, %s298, 1
        %s301 = scalar_lea.vmem %s2, %s300
        %s302 = smul.u32 2, %s25
        %s303 = smul.u32 32, %s25
        %s304 = smul.u32 4, %s24
        %p306 = scmp.eq.s32.totalorder %s25, 0
        // Predicated region
        $region45: #{tpu_custom_call.1} parent=39 // pred_check
          %p307 = pneg %p306
        $region46: #{tpu_custom_call.1} parent=39 // pred_check_branch
          %309 = sbr.rel (%p307) target = $region48
        $region47: #{tpu_custom_call.1} parent=39 // pred_region
          %310 = vst [vmem:[#allocation2] sm:$0xff] 0.0
          %311 = vst [vmem:[#allocation2 + $0x8] sm:$0xff] 0.0
          %312 = vst [vmem:[#allocation2 + $0x10] sm:$0xff] 0.0
          %313 = vst [vmem:[#allocation2 + $0x18] sm:$0xff] 0.0
        $region48: #{tpu_custom_call.1} parent=39 // pred_fallthru
          _
        %v314 = vld [vmem:[%s290] sm:$0xff]
        %v315 = vld [vmem:[%s290 + $0x8] sm:$0xff]
        %v316 = vld [vmem:[%s290 + $0x10] sm:$0xff]
        %v317 = vld [vmem:[%s290 + $0x18] sm:$0xff]
        %v318 = vpack.c.bf16 %v315, %v314
        %v319 = vpack.c.bf16 %v317, %v316
        %v320 = vld [vmem:[%s296] sm:$0xff]
        %v321 = vld [vmem:[%s296 + $0x8] sm:$0xff]
        %v322 = vld [vmem:[%s296 + $0x10] sm:$0xff]
        %v323 = vld [vmem:[%s296 + $0x18] sm:$0xff]
        %v324 = vld [vmem:[%s301] sm:$0x3]
        %v326 = vperm.slane %v324, 0
        %v327 = vperm.slane %v324, 1
        %v334 = vunpack.c.l.b16 %v320
        %v335 = vunpack.c.h.b16 %v320
        %v336 = vunpack.c.l.b16 %v321
        %v337 = vunpack.c.h.b16 %v321
        %v338 = vunpack.c.l.b16 %v322
        %v339 = vunpack.c.h.b16 %v322
        %v340 = vunpack.c.l.b16 %v323
        %v341 = vunpack.c.h.b16 %v323
        %v342 = vpack.c.b16 %v336, %v334
        %v343 = vpack.c.b16 %v337, %v335
        %v344 = vpack.c.b16 %v340, %v338
        %v345 = vpack.c.b16 %v341, %v339
        %vm350 = vcmask 261120
        %v352 = vsel %vm350, %v318, 0
        %v355 = vsel %vm350, %v319, 0
        %357 = vmatpush.bf16.msra.mxu0 0
        %358 = vmatpush.bf16.msra.mxu0 0
        %359 = vmatpush.bf16.msra.mxu0 0
        %360 = vmatpush.bf16.msra.mxu0 0
        %361 = vmatpush.bf16.msra.mxu0 0
        %362 = vmatpush.bf16.msra.mxu0 0
        %363 = vmatpush.bf16.msra.mxu0 %v344
        %364 = vmatpush.bf16.msra.mxu0 %v342
        %365 = vmatmul.bf16.gmra.mxu0 %v352
        %v366 = vpop.f32.mrf.mxu0
        %v367 = vadd.f32 %v326, %v366
        %v368 = vpop.f32.mrf.mxu0
        %v369 = vadd.f32 %v326, %v368
        %370 = vmatmul.bf16.gmra.mxu0 %v355
        %v371 = vpop.f32.mrf.mxu0
        %v372 = vadd.f32 %v326, %v371
        %v373 = vpop.f32.mrf.mxu0
        %v374 = vadd.f32 %v326, %v373
        %375 = vdwg.mxu0
        %376 = vmatpush.bf16.msra.mxu0 0
        %377 = vmatpush.bf16.msra.mxu0 0
        %378 = vmatpush.bf16.msra.mxu0 0
        %379 = vmatpush.bf16.msra.mxu0 0
        %380 = vmatpush.bf16.msra.mxu0 0
        %381 = vmatpush.bf16.msra.mxu0 0
        %382 = vmatpush.bf16.msra.mxu0 %v345
        %383 = vmatpush.bf16.msra.mxu0 %v343
        %384 = vmatmul.bf16.gmra.mxu0 %v352
        %v385 = vpop.f32.mrf.mxu0
        %v386 = vadd.f32 %v327, %v385
        %v387 = vpop.f32.mrf.mxu0
        %v388 = vadd.f32 %v327, %v387
        %389 = vmatmul.bf16.gmra.mxu0 %v355
        %v390 = vpop.f32.mrf.mxu0
        %v391 = vadd.f32 %v327, %v390
        %v392 = vpop.f32.mrf.mxu0
        %v393 = vadd.f32 %v327, %v392
        %394 = vdwg.mxu0
        %v395 = vmax.f32 %v367, 0.0
        %v396 = vmax.f32 %v386, 0.0
        %v397 = vmax.f32 %v369, 0.0
        %v398 = vmax.f32 %v388, 0.0
        %v399 = vmax.f32 %v372, 0.0
        %v400 = vmax.f32 %v391, 0.0
        %v401 = vmax.f32 %v374, 0.0
        %v402 = vmax.f32 %v393, 0.0
        %v403 = vpack.c.bf16 %v397, %v395
        %v404 = vpack.c.bf16 %v398, %v396
        %v405 = vpack.c.bf16 %v401, %v399
        %v406 = vpack.c.bf16 %v402, %v400
        %v407 = vld [vmem:[#allocation2] sm:$0xff]
        %v408 = vld [vmem:[#allocation2 + $0x8] sm:$0xff]
        %v409 = vld [vmem:[#allocation2 + $0x10] sm:$0xff]
        %v410 = vld [vmem:[#allocation2 + $0x18] sm:$0xff]
        %v411 = vld [vmem:[#allocation3] sm:$0xf]
        %v412 = vld [vmem:[#allocation3 + $0x4] sm:$0xf]
        %v413 = vld [vmem:[#allocation3 + $0x8] sm:$0xf]
        %v414 = vld [vmem:[#allocation3 + $0xc] sm:$0xf]
        %v415 = vld [vmem:[#allocation3 + $0x10] sm:$0xf]
        %v416 = vld [vmem:[#allocation3 + $0x14] sm:$0xf]
        %v417 = vld [vmem:[#allocation3 + $0x18] sm:$0xf]
        %v418 = vld [vmem:[#allocation3 + $0x1c] sm:$0xf]
        %v419 = vld [vmem:[#allocation3 + $0x20] sm:$0xf]
        %v420 = vld [vmem:[#allocation3 + $0x24] sm:$0xf]
        %v421 = vld [vmem:[#allocation3 + $0x28] sm:$0xf]
        %v422 = vld [vmem:[#allocation3 + $0x2c] sm:$0xf]
        %v423 = vld [vmem:[#allocation3 + $0x30] sm:$0xf]
        %v424 = vld [vmem:[#allocation3 + $0x34] sm:$0xf]
        %v425 = vld [vmem:[#allocation3 + $0x38] sm:$0xf]
        %v426 = vld [vmem:[#allocation3 + $0x3c] sm:$0xf]
        %v427 = vld [vmem:[#allocation3 + $0x40] sm:$0xf]
        %v428 = vld [vmem:[#allocation3 + $0x44] sm:$0xf]
        %v429 = vld [vmem:[#allocation3 + $0x48] sm:$0xf]
        %v430 = vld [vmem:[#allocation3 + $0x4c] sm:$0xf]
        %v431 = vld [vmem:[#allocation3 + $0x50] sm:$0xf]
        %v432 = vld [vmem:[#allocation3 + $0x54] sm:$0xf]
        %v433 = vld [vmem:[#allocation3 + $0x58] sm:$0xf]
        %v434 = vld [vmem:[#allocation3 + $0x5c] sm:$0xf]
        %v435 = vld [vmem:[#allocation3 + $0x60] sm:$0xf]
        %v436 = vld [vmem:[#allocation3 + $0x64] sm:$0xf]
        %v437 = vld [vmem:[#allocation3 + $0x68] sm:$0xf]
        %v438 = vld [vmem:[#allocation3 + $0x6c] sm:$0xf]
        %v439 = vld [vmem:[#allocation3 + $0x70] sm:$0xf]
        %v440 = vld [vmem:[#allocation3 + $0x74] sm:$0xf]
        %v441 = vld [vmem:[#allocation3 + $0x78] sm:$0xf]
        %v442 = vld [vmem:[#allocation3 + $0x7c] sm:$0xf]
        %v475 = vunpack.c.l.b16 %v411
        %v476 = vunpack.c.l.b16 %v412
        %v477 = vunpack.c.l.b16 %v413
        %v478 = vunpack.c.l.b16 %v414
        %v479 = vunpack.c.l.b16 %v415
        %v480 = vunpack.c.l.b16 %v416
        %v481 = vunpack.c.l.b16 %v417
        %v482 = vunpack.c.l.b16 %v418
        %v483 = vunpack.c.l.b16 %v419
        %v484 = vunpack.c.l.b16 %v420
        %v485 = vunpack.c.l.b16 %v421
        %v486 = vunpack.c.l.b16 %v422
        %v487 = vunpack.c.l.b16 %v423
        %v488 = vunpack.c.l.b16 %v424
        %v489 = vunpack.c.l.b16 %v425
        %v490 = vunpack.c.l.b16 %v426
        %v491 = vunpack.c.l.b16 %v427
        %v492 = vunpack.c.l.b16 %v428
        %v493 = vunpack.c.l.b16 %v429
        %v494 = vunpack.c.l.b16 %v430
        %v495 = vunpack.c.l.b16 %v431
        %v496 = vunpack.c.l.b16 %v432
        %v497 = vunpack.c.l.b16 %v433
        %v498 = vunpack.c.l.b16 %v434
        %v499 = vunpack.c.l.b16 %v435
        %v500 = vunpack.c.l.b16 %v436
        %v501 = vunpack.c.l.b16 %v437
        %v502 = vunpack.c.l.b16 %v438
        %v503 = vunpack.c.l.b16 %v439
        %v504 = vunpack.c.l.b16 %v440
        %v505 = vunpack.c.l.b16 %v441
        %v506 = vunpack.c.l.b16 %v442
        %v507 = vpack.c.b16 %v476, %v475
        %v508 = vpack.c.b16 %v478, %v477
        %v509 = vpack.c.b16 %v480, %v479
        %v510 = vpack.c.b16 %v482, %v481
        %v511 = vpack.c.b16 %v484, %v483
        %v512 = vpack.c.b16 %v486, %v485
        %v513 = vpack.c.b16 %v488, %v487
        %v514 = vpack.c.b16 %v490, %v489
        %v515 = vpack.c.b16 %v492, %v491
        %v516 = vpack.c.b16 %v494, %v493
        %v517 = vpack.c.b16 %v496, %v495
        %v518 = vpack.c.b16 %v498, %v497
        %v519 = vpack.c.b16 %v500, %v499
        %v520 = vpack.c.b16 %v502, %v501
        %v521 = vpack.c.b16 %v504, %v503
        %v522 = vpack.c.b16 %v506, %v505
        %539 = vmatpush.bf16.msra.mxu0 %v514
        %540 = vmatpush.bf16.msra.mxu0 %v513
        %541 = vmatpush.bf16.msra.mxu0 %v512
        %542 = vmatpush.bf16.msra.mxu0 %v511
        %543 = vmatpush.bf16.msra.mxu0 %v510
        %544 = vmatpush.bf16.msra.mxu0 %v509
        %545 = vmatpush.bf16.msra.mxu0 %v508
        %546 = vmatpush.bf16.msra.mxu0 %v507
        %547 = vmatmul.bf16.gmra.mxu0 %v403
        %v548 = vpop.f32.mrf.mxu0
        %v549 = vadd.f32 0.0, %v548
        %v550 = vpop.f32.mrf.mxu0
        %v551 = vadd.f32 0.0, %v550
        %552 = vmatmul.bf16.gmra.mxu0 %v405
        %v553 = vpop.f32.mrf.mxu0
        %v554 = vadd.f32 0.0, %v553
        %v555 = vpop.f32.mrf.mxu0
        %v556 = vadd.f32 0.0, %v555
        %557 = vdwg.mxu0
        %558 = vmatpush.bf16.msra.mxu0 %v522
        %559 = vmatpush.bf16.msra.mxu0 %v521
        %560 = vmatpush.bf16.msra.mxu0 %v520
        %561 = vmatpush.bf16.msra.mxu0 %v519
        %562 = vmatpush.bf16.msra.mxu0 %v518
        %563 = vmatpush.bf16.msra.mxu0 %v517
        %564 = vmatpush.bf16.msra.mxu0 %v516
        %565 = vmatpush.bf16.msra.mxu0 %v515
        %566 = vmatmul.bf16.gmra.mxu0 %v404
        %v567 = vpop.f32.mrf.mxu0
        %v568 = vadd.f32 %v549, %v567
        %v569 = vpop.f32.mrf.mxu0
        %v570 = vadd.f32 %v551, %v569
        %571 = vmatmul.bf16.gmra.mxu0 %v406
        %v572 = vpop.f32.mrf.mxu0
        %v573 = vadd.f32 %v554, %v572
        %v574 = vpop.f32.mrf.mxu0
        %v575 = vadd.f32 %v556, %v574
        %576 = vdwg.mxu0
        %v577 = vadd.f32 %v407, %v568
        %v578 = vadd.f32 %v408, %v570
        %v579 = vadd.f32 %v409, %v573
        %v580 = vadd.f32 %v410, %v575
        %581 = vst [vmem:[#allocation2] sm:$0xff] %v577
        %582 = vst [vmem:[#allocation2 + $0x8] sm:$0xff] %v578
        %583 = vst [vmem:[#allocation2 + $0x10] sm:$0xff] %v579
        %584 = vst [vmem:[#allocation2 + $0x18] sm:$0xff] %v580
        // Predicated region
        $region49: #{tpu_custom_call.1} parent=39 // pred_check
          %p585 = pneg %p306
        $region50: #{tpu_custom_call.1} parent=39 // pred_check_branch
          %587 = sbr.rel (%p585) target = $region52
        $region51: #{tpu_custom_call.1} parent=39 // pred_region
          %v588 = vld [vmem:[#allocation2] sm:$0xff]
          %v589 = vld [vmem:[#allocation2 + $0x8] sm:$0xff]
          %v590 = vld [vmem:[#allocation2 + $0x10] sm:$0xff]
          %v591 = vld [vmem:[#allocation2 + $0x18] sm:$0xff]
          %v592 = vld [vmem:[%s4] sm:$0x1]
          %v594 = vperm.slane %v592, 0
          %v596 = vadd.f32 %v588, %v594
          %v597 = vadd.f32 %v589, %v594
          %v598 = vadd.f32 %v590, %v594
          %v599 = vadd.f32 %v591, %v594
          %600 = vst [vmem:[%s285] sm:$0xff] %v596
          %601 = vst [vmem:[%s285 + $0x8] sm:$0xff] %v597
          %602 = vst [vmem:[%s285 + $0x10] sm:$0xff] %v598
          %603 = vst [vmem:[%s285 + $0x18] sm:$0xff] %v599
        $region52: #{tpu_custom_call.1} parent=39 // pred_fallthru
          _
        %s604 = sand.u32 %s165, 1
        %s605 = scalar_lea.sflag [#allocation5], %s604
        %s606 = sand.u32 %s165, 1
        %s607 = smul.addr %s606, 32
        %s608 = scalar_lea.vmem [#allocation6], %s607
        // Predicated region
        $region53: #{tpu_custom_call.1} parent=39 // pred_check
          %p609 = pneg %p175
        $region54: #{tpu_custom_call.1} parent=39 // pred_check_branch
          %611 = sbr.rel (%p609) target = $region56
        $region55: #{tpu_custom_call.1} parent=39 // pred_region
          %s612 = smul.u32 4, %s24
          %614 = vsyncadd %s605, 0
          %s615 = smul.addr %s612, 8
          %s616 = scalar_lea.hbm %s5, %s615
          %s617 = sshll.u32 %s608, 4
          %s618 = int_to_ptr.vmem [resolvable:$true] %s617
          %s619 = sshll.u32 %s616, 4
          %s620 = int_to_ptr.hbm [resolvable:$true] %s619
          %625 = dma.vmem_to_hbm [thread:$0]  %s618, 512, %s620, %s605, 128, 128, 8
        $region56: #{tpu_custom_call.1} parent=39 // pred_fallthru
          _
      $region40: #{tpu_custom_call.1} parent=5 // pred_fallthru
        _
      %p626 = scmp.le.s32.totalorder 2, %s15
      // Predicated region
      $region57: #{tpu_custom_call.1} parent=5 // pred_check
        %p627 = pneg %p626
      $region58: #{tpu_custom_call.1} parent=5 // pred_check_branch
        %629 = sbr.rel (%p627) target = $region60
      $region59: #{tpu_custom_call.1} parent=5 // pred_region
        %s630 = ssub.s32 %s15, 2
        // Predicated region
        $region61: #{tpu_custom_call.1} parent=59 // pred_check
          %p631 = pneg %p181
        $region62: #{tpu_custom_call.1} parent=59 // pred_check_branch
          %633 = sbr.rel (%p631) target = $region64
        $region63: #{tpu_custom_call.1} parent=59 // pred_region
          %s634 = sand.u32 %s166, 1
          %s635 = scalar_lea.sflag [#allocation5], %s634
          %s636 = sand.u32 %s166, 1
          %s637 = smul.addr %s636, 32
          %s638 = scalar_lea.vmem [#allocation6], %s637
          %640 = dma.done %s635, 512
        $region64: #{tpu_custom_call.1} parent=59 // pred_fallthru
          _
      $region60: #{tpu_custom_call.1} parent=5 // pred_fallthru
        _
    $region6: #{tpu_custom_call.1} parent=1 // loop_footer
      %s19 = sadd.s32 1, %s15
    $region7: #{tpu_custom_call.1} parent=1 // loop_footer_branch
      %14 = sbr.rel target = $region3
    $region8: #{tpu_custom_call.1} parent=1 // loop_exit
      _
    %641 = vsyncpa [#allocation4], 1
    %s642 = scalar_lea.sflag [#allocation4], 1
    %643 = vsyncpa %s642, 1
    %644 = vsyncpa [#allocation5], 1
    %s645 = scalar_lea.sflag [#allocation5], 1
    %646 = vsyncpa %s645, 1

// kernel: tpu_custom_call.1
$region0: #{tpu_custom_call.1}
  #allocation0 [shape = 'u32[]', space=smem, size = 0x4, offset = 0x4, fixed_abs, tag = 'smem constant byte address 0x4 - core index']
  #allocation1 [shape = 'u32[72,128]{1,0:T(1,128)}', space=vmem, size = 0x9000, scoped, tag = 'internal scratch']
  #allocation2 [shape = 'f32[32,128]{1,0:T(8,128)}', space=vmem, size = 0x4000, scoped, tag = 'scratch operand']
  %s0 = inlined_call_operand.vmem [shape: f32[64,32], index: 0, kind: input, shape index: {}]
  %s1 = inlined_call_operand.vmem [shape: bf16[32,256], index: 1, kind: input, shape index: {}]
  %s2 = inlined_call_operand.vmem [shape: f32[1,256], index: 2, kind: input, shape index: {}]
  %s3 = inlined_call_operand.hbm [shape: bf16[256,128], index: 3, kind: input, shape index: {}]
  %s4 = inlined_call_operand.vmem [shape: f32[1,128], index: 4, kind: input, shape index: {}]
  %s5 = inlined_call_operand.hbm [shape: f32[64,128], index: 5, kind: output, shape index: {}]
  %s6 = sld [smem:[#allocation0]]
  $region65: #{tpu_custom_call.1} parent=0
    _
  %s8 = ssub.s32 1, %s6
  %s9 = scalar_select 0, %s8, %s6
  $region1: #{tpu_custom_call.1} parent=0
    #allocation3 [shape = 'u8[65536]{0}', space=vmem, size = 0x10000, scoped, tag = 'input window, operand 3, single buffered']
    #allocation4 [shape = 's32[2]{0}', space=sflag, size = 0x8, scoped, tag = 'scoped memory for tpu_custom_call.1']
    #allocation5 [shape = 's32[2]{0}', space=sflag, size = 0x8, scoped, tag = 'scoped memory for tpu_custom_call.1']
    #allocation6 [shape = 'u8[32768]{0}', space=vmem, size = 0x8000, scoped, tag = 'output window, operand 0']
    %10 = vsyncpa [#allocation4], 0
    %11 = vsyncpa [#allocation5], 0
    %s12 = scalar_lea.sflag [#allocation5], 1
    %13 = vsyncpa %s12, 0
    loop: start=0, step=1, limit=4
    $region2: #{tpu_custom_call.1} parent=1 // loop_pre_header
      _
    $region3: #{tpu_custom_call.1} parent=1 // loop_header
      %s15 = sphi 0, %s19
      %p16 = scmp.ge.s32.totalorder %s15, 4
      %s22 = sphi 0, %s34
      %s23 = sphi 0, %s30
      %s24 = sphi 0, %s22
      %s25 = sphi 0, %s23
      %s26 = sphi 0, %s24
      %s27 = sphi 0, %s25
      %s37 = sphi 0, %s39
      %s40 = sphi 0, %s37
      %s41 = sphi 0, %s40
      %s57 = sphi 0, %s41
      %s63 = sphi 0, %s65
      %s66 = sphi 0, %s63
      %s67 = sphi 0, %s66
      %s83 = sphi 0, %s67
      %s89 = sphi 0, %s91
      %s92 = sphi 0, %s89
      %s93 = sphi 0, %s92
      %s109 = sphi 0, %s93
      %s115 = sphi 0, %s117
      %s118 = sphi 0, %s115
      %s119 = sphi 0, %s118
      %s135 = sphi 0, %s119
      %s139 = sphi 0, %s139
      %s141 = sphi 0, %s139
      %s142 = sphi 0, %s141
      %s156 = sphi 0, %s142
      %s162 = sphi 0, %s164
      %s165 = sphi 0, %s162
      %s166 = sphi 0, %s165
      %s182 = sphi 0, %s166
    $region4: #{tpu_custom_call.1} parent=1 // loop_header_branch
      %18 = sbr.rel (%p16) target = $region8
    $region5: #{tpu_custom_call.1} parent=1 // loop_body
      %s20 = ssub.s32 %s15, 1
      %s21 = ssub.s32 %s15, 2
      %s28 = sadd.s32 1, %s23
      %p29 = scmp.ge.s32.totalorder %s28, 1
      %s30 = scalar_select %p29, 0, %s28
      %s31 = sadd.s32 1, %s22
      %s32 = scalar_select %p29, %s31, %s22
      %p33 = scmp.ge.s32.totalorder %s32, 2
      %s34 = scalar_select %p33, 0, %s32
      %s35 = ssub.s32 %s22, %s34
      %p36 = scmp.eq.s32.totalorder %s35, 0
      %s38 = sadd.s32 %s37, 1
      %s39 = scalar_select %p36, %s37, %s38
      %p42 = pneg %p36
      %p43 = scmp.eq.s32.totalorder %s15, 1
      %p44 = por %p42, %p43
      %p45 = scmp.ne.s32.totalorder %s37, %s40
      %p46 = scmp.eq.s32.totalorder %s15, 0
      %p47 = por %p45, %p46
      %p48 = scmp.ne.s32.totalorder %s37, %s40
      %p49 = scmp.eq.s32.totalorder %s20, 1
      %p50 = por %p48, %p49
      %p51 = scmp.ne.s32.totalorder %s40, %s41
      %p52 = scmp.eq.s32.totalorder %s20, 0
      %p53 = por %p51, %p52
      %p54 = scmp.ne.s32.totalorder %s40, %s41
      %p55 = scmp.eq.s32.totalorder %s21, 1
      %p56 = por %p54, %p55
      %p58 = scmp.ne.s32.totalorder %s41, %s57
      %p59 = scmp.eq.s32.totalorder %s21, 0
      %p60 = por %p58, %p59
      %s61 = ssub.s32 %s23, %s30
      %p62 = scmp.eq.s32.totalorder %s61, 0
      %s64 = sadd.s32 %s63, 1
      %s65 = scalar_select %p62, %s63, %s64
      %p68 = pneg %p62
      %p69 = scmp.eq.s32.totalorder %s15, 1
      %p70 = por %p68, %p69
      %p71 = scmp.ne.s32.totalorder %s63, %s66
      %p72 = scmp.eq.s32.totalorder %s15, 0
      %p73 = por %p71, %p72
      %p74 = scmp.ne.s32.totalorder %s63, %s66
      %p75 = scmp.eq.s32.totalorder %s20, 1
      %p76 = por %p74, %p75
      %p77 = scmp.ne.s32.totalorder %s66, %s67
      %p78 = scmp.eq.s32.totalorder %s20, 0
      %p79 = por %p77, %p78
      %p80 = scmp.ne.s32.totalorder %s66, %s67
      %p81 = scmp.eq.s32.totalorder %s21, 1
      %p82 = por %p80, %p81
      %p84 = scmp.ne.s32.totalorder %s67, %s83
      %p85 = scmp.eq.s32.totalorder %s21, 0
      %p86 = por %p84, %p85
      %s87 = ssub.s32 %s23, %s30
      %p88 = scmp.eq.s32.totalorder %s87, 0
      %s90 = sadd.s32 %s89, 1
      %s91 = scalar_select %p88, %s89, %s90
      %p94 = pneg %p88
      %p95 = scmp.eq.s32.totalorder %s15, 1
      %p96 = por %p94, %p95
      %p97 = scmp.ne.s32.totalorder %s89, %s92
      %p98 = scmp.eq.s32.totalorder %s15, 0
      %p99 = por %p97, %p98
      %p100 = scmp.ne.s32.totalorder %s89, %s92
      %p101 = scmp.eq.s32.totalorder %s20, 1
      %p102 = por %p100, %p101
      %p103 = scmp.ne.s32.totalorder %s92, %s93
      %p104 = scmp.eq.s32.totalorder %s20, 0
      %p105 = por %p103, %p104
      %p106 = scmp.ne.s32.totalorder %s92, %s93
      %p107 = scmp.eq.s32.totalorder %s21, 1
      %p108 = por %p106, %p107
      %p110 = scmp.ne.s32.totalorder %s93, %s109
      %p111 = scmp.eq.s32.totalorder %s21, 0
      %p112 = por %p110, %p111
      %s113 = ssub.s32 %s23, %s30
      %p114 = scmp.eq.s32.totalorder %s113, 0
      %s116 = sadd.s32 %s115, 1
      %s117 = scalar_select %p114, %s115, %s116
      %p120 = pneg %p114
      %p121 = scmp.eq.s32.totalorder %s15, 1
      %p122 = por %p120, %p121
      %p123 = scmp.ne.s32.totalorder %s115, %s118
      %p124 = scmp.eq.s32.totalorder %s15, 0
      %p125 = por %p123, %p124
      %p126 = scmp.ne.s32.totalorder %s115, %s118
      %p127 = scmp.eq.s32.totalorder %s20, 1
      %p128 = por %p126, %p127
      %p129 = scmp.ne.s32.totalorder %s118, %s119
      %p130 = scmp.eq.s32.totalorder %s20, 0
      %p131 = por %p129, %p130
      %p132 = scmp.ne.s32.totalorder %s118, %s119
      %p133 = scmp.eq.s32.totalorder %s21, 1
      %p134 = por %p132, %p133
      %p136 = scmp.ne.s32.totalorder %s119, %s135
      %p137 = scmp.eq.s32.totalorder %s21, 0
      %p138 = por %p136, %p137
      %s140 = sadd.s32 %s139, 1
      %p143 = scmp.eq.s32.totalorder %s15, 1
      %p144 = scmp.ne.s32.totalorder %s139, %s141
      %p145 = scmp.eq.s32.totalorder %s15, 0
      %p146 = por %p144, %p145
      %p147 = scmp.ne.s32.totalorder %s139, %s141
      %p148 = scmp.eq.s32.totalorder %s20, 1
      %p149 = por %p147, %p148
      %p150 = scmp.ne.s32.totalorder %s141, %s142
      %p151 = scmp.eq.s32.totalorder %s20, 0
      %p152 = por %p150, %p151
      %p153 = scmp.ne.s32.totalorder %s141, %s142
      %p154 = scmp.eq.s32.totalorder %s21, 1
      %p155 = por %p153, %p154
      %p157 = scmp.ne.s32.totalorder %s142, %s156
      %p158 = scmp.eq.s32.totalorder %s21, 0
      %p159 = por %p157, %p158
      %s160 = ssub.s32 %s22, %s34
      %p161 = scmp.eq.s32.totalorder %s160, 0
      %s163 = sadd.s32 %s162, 1
      %s164 = scalar_select %p161, %s162, %s163
      %p167 = pneg %p161
      %p168 = scmp.eq.s32.totalorder %s15, 1
      %p169 = por %p167, %p168
      %p170 = scmp.ne.s32.totalorder %s162, %s165
      %p171 = scmp.eq.s32.totalorder %s15, 0
      %p172 = por %p170, %p171
      %p173 = scmp.ne.s32.totalorder %s162, %s165
      %p174 = scmp.eq.s32.totalorder %s20, 1
      %p175 = por %p173, %p174
      %p176 = scmp.ne.s32.totalorder %s165, %s166
      %p177 = scmp.eq.s32.totalorder %s20, 0
      %p178 = por %p176, %p177
      %p179 = scmp.ne.s32.totalorder %s165, %s166
      %p180 = scmp.eq.s32.totalorder %s21, 1
      %p181 = por %p179, %p180
      %p183 = scmp.ne.s32.totalorder %s166, %s182
      %p184 = scmp.eq.s32.totalorder %s21, 0
      %p185 = por %p183, %p184
      %p186 = scmp.le.s32.totalorder 1, %s15
      %p187 = scmp.lt.s32.totalorder %s15, 3
      %p188 = pnand %p186, %p187
      %p189 = pneg %p188
      // Predicated region
      $region9: #{tpu_custom_call.1} parent=5 // pred_check
        _
      $region10: #{tpu_custom_call.1} parent=5 // pred_check_branch
        %191 = sbr.rel (%p188) target = $region12
      $region11: #{tpu_custom_call.1} parent=5 // pred_region
        %s192 = ssub.s32 %s15, 1
        // Predicated region
        $region13: #{tpu_custom_call.1} parent=11 // pred_check
          %p193 = pneg %p79
        $region14: #{tpu_custom_call.1} parent=11 // pred_check_branch
          %195 = sbr.rel (%p193) target = $region16
        $region15: #{tpu_custom_call.1} parent=11 // pred_region
          %s196 = smul.u32 2, %s25
          %p197 = scmp.lt.s32.totalorder %s196, 1
          %s198 = scalar_select %p197, %s196, 1
          %s199 = smul.addr %s198, 4
          %s200 = scalar_lea.vmem %s1, %s199
          %s201 = smul.u32 2, %s25
        $region16: #{tpu_custom_call.1} parent=11 // pred_fallthru
          _
        // Predicated region
        $region17: #{tpu_custom_call.1} parent=11 // pred_check
          %p202 = pneg %p105
        $region18: #{tpu_custom_call.1} parent=11 // pred_check_branch
          %204 = sbr.rel (%p202) target = $region20
        $region19: #{tpu_custom_call.1} parent=11 // pred_region
          %s205 = smul.u32 2, %s25
          %p206 = scmp.lt.s32.totalorder %s205, 1
          %s207 = scalar_select %p206, %s205, 1
          %s208 = scalar_lea.vmem %s2, %s207
          %s209 = smul.u32 2, %s25
        $region20: #{tpu_custom_call.1} parent=11 // pred_fallthru
          _
        // Predicated region
        $region21: #{tpu_custom_call.1} parent=11 // pred_check
          %p210 = pneg %p131
        $region22: #{tpu_custom_call.1} parent=11 // pred_check_branch
          %212 = sbr.rel (%p210) target = $region24
        $region23: #{tpu_custom_call.1} parent=11 // pred_region
          %s213 = smul.u32 32, %s25
          %215 = vsyncadd [#allocation4], 0
          %s216 = smul.addr %s213, 4
          %s217 = scalar_lea.hbm %s3, %s216
          %s218 = sshll.u32 %s217, 4
          %s219 = int_to_ptr.hbm [resolvable:$true] %s218
          %s220 = sshll.u32 [#allocation3], 4
          %s221 = int_to_ptr.vmem [resolvable:$true] %s220
          %226 = dma.hbm_to_vmem [thread:$0]  %s219, 2048, %s221, [#allocation4], 64, 64, 4
        $region24: #{tpu_custom_call.1} parent=11 // pred_fallthru
          _
        // Predicated region
        $region25: #{tpu_custom_call.1} parent=11 // pred_check
          %p227 = pneg %p152
        $region26: #{tpu_custom_call.1} parent=11 // pred_check_branch
          %229 = sbr.rel (%p227) target = $region28
        $region27: #{tpu_custom_call.1} parent=11 // pred_region
          _
        $region28: #{tpu_custom_call.1} parent=11 // pred_fallthru
          _
      $region12: #{tpu_custom_call.1} parent=5 // pred_fallthru
        _
      %p230 = scmp.lt.s32.totalorder %s15, 2
      // Predicated region
      $region29: #{tpu_custom_call.1} parent=5 // pred_check
        %p231 = pneg %p230
      $region30: #{tpu_custom_call.1} parent=5 // pred_check_branch
        %233 = sbr.rel (%p231) target = $region32
      $region31: #{tpu_custom_call.1} parent=5 // pred_region
        // Predicated region
        $region33: #{tpu_custom_call.1} parent=31 // pred_check
          %p234 = pneg %p47
        $region34: #{tpu_custom_call.1} parent=31 // pred_check_branch
          %236 = sbr.rel (%p234) target = $region36
        $region35: #{tpu_custom_call.1} parent=31 // pred_region
          %s237 = smul.u32 4, %s22
          %p238 = scmp.lt.s32.totalorder %s237, 7
          %s239 = scalar_select %p238, %s237, 7
          %s240 = smul.addr %s239, 8
          %s241 = scalar_lea.vmem %s0, %s240
          %s242 = smul.u32 4, %s22
        $region36: #{tpu_custom_call.1} parent=31 // pred_fallthru
          _
      $region32: #{tpu_custom_call.1} parent=5 // pred_fallthru
        _
      %p243 = scmp.le.s32.totalorder 1, %s15
      %p244 = scmp.lt.s32.totalorder %s15, 3
      %p245 = pnand %p243, %p244
      %p246 = pneg %p245
      // Predicated region
      $region37: #{tpu_custom_call.1} parent=5 // pred_check
        _
      $region38: #{tpu_custom_call.1} parent=5 // pred_check_branch
        %248 = sbr.rel (%p245) target = $region40
      $region39: #{tpu_custom_call.1} parent=5 // pred_region
        %s249 = ssub.s32 %s15, 1
        // Predicated region
        $region41: #{tpu_custom_call.1} parent=39 // pred_check
          %p250 = pneg %p131
        $region42: #{tpu_custom_call.1} parent=39 // pred_check_branch
          %252 = sbr.rel (%p250) target = $region44
        $region43: #{tpu_custom_call.1} parent=39 // pred_region
          %254 = dma.done [#allocation4], 2048
        $region44: #{tpu_custom_call.1} parent=39 // pred_fallthru
          _
        %s255 = smul.u32 4, %s24
        %p256 = scmp.lt.s32.totalorder %s255, 7
        %s257 = scalar_select %p256, %s255, 7
        %s258 = smul.addr %s257, 8
        %s259 = scalar_lea.vmem %s0, %s258
        %p260 = pneg %p53
        %p261 = pneg %p50
        %s262 = smul.u32 2, %s25
        %p263 = scmp.lt.s32.totalorder %s262, 1
        %s264 = scalar_select %p263, %s262, 1
        %s265 = smul.addr %s264, 4
        %s266 = scalar_lea.vmem %s1, %s265
        %p267 = pneg %p79
        %p268 = pneg %p76
        %s269 = smul.u32 2, %s25
        %p270 = scmp.lt.s32.totalorder %s269, 1
        %s271 = scalar_select %p270, %s269, 1
        %s272 = scalar_lea.vmem %s2, %s271
        %p273 = pneg %p105
        %p274 = pneg %p102
        %p275 = pneg %p131
        %p276 = pneg %p128
        %p277 = pneg %p152
        %p278 = pneg %p149
        %p279 = pneg %p178
        %p280 = pneg %p175
        %s281 = sand.u32 %s165, 1
        %s282 = scalar_lea.sflag [#allocation5], %s281
        %s283 = sand.u32 %s165, 1
        %s284 = smul.addr %s283, 32
        %s285 = scalar_lea.vmem [#allocation6], %s284
        %s286 = smul.u32 4, %s24
        %p287 = scmp.lt.s32.totalorder %s286, 7
        %s288 = scalar_select %p287, %s286, 7
        %s289 = smul.addr %s288, 8
        %s290 = scalar_lea.vmem %s0, %s289
        %s291 = smul.u32 4, %s24
        %s292 = smul.u32 2, %s25
        %p293 = scmp.lt.s32.totalorder %s292, 1
        %s294 = scalar_select %p293, %s292, 1
        %s295 = smul.addr %s294, 4
        %s296 = scalar_lea.vmem %s1, %s295
        %s297 = smul.u32 2, %s25
        %s298 = smul.u32 2, %s25
        %p299 = scmp.lt.s32.totalorder %s298, 1
        %s300 = scalar_select %p299, %s298, 1
        %s301 = scalar_lea.vmem %s2, %s300
        %s302 = smul.u32 2, %s25
        %s303 = smul.u32 32, %s25
        %s304 = smul.u32 4, %s24
        %p306 = scmp.eq.s32.totalorder %s25, 0
        // Predicated region
        $region45: #{tpu_custom_call.1} parent=39 // pred_check
          %p307 = pneg %p306
        $region46: #{tpu_custom_call.1} parent=39 // pred_check_branch
          %309 = sbr.rel (%p307) target = $region48
        $region47: #{tpu_custom_call.1} parent=39 // pred_region
          %310 = vst [vmem:[#allocation2] sm:$0xff] 0.0
          %311 = vst [vmem:[#allocation2 + $0x8] sm:$0xff] 0.0
          %312 = vst [vmem:[#allocation2 + $0x10] sm:$0xff] 0.0
          %313 = vst [vmem:[#allocation2 + $0x18] sm:$0xff] 0.0
        $region48: #{tpu_custom_call.1} parent=39 // pred_fallthru
          _
        %v314 = vld [vmem:[%s290] sm:$0xff]
        %v315 = vld [vmem:[%s290 + $0x8] sm:$0xff]
        %v316 = vld [vmem:[%s290 + $0x10] sm:$0xff]
        %v317 = vld [vmem:[%s290 + $0x18] sm:$0xff]
        %v318 = vpack.c.bf16 %v315, %v314
        %v319 = vpack.c.bf16 %v317, %v316
        %v320 = vld [vmem:[%s296] sm:$0xff]
        %v321 = vld [vmem:[%s296 + $0x8] sm:$0xff]
        %v322 = vld [vmem:[%s296 + $0x10] sm:$0xff]
        %v323 = vld [vmem:[%s296 + $0x18] sm:$0xff]
        %v324 = vld [vmem:[%s301] sm:$0x3]
        %v326 = vperm.slane %v324, 0
        %v327 = vperm.slane %v324, 1
        %v334 = vunpack.c.l.b16 %v320
        %v335 = vunpack.c.h.b16 %v320
        %v336 = vunpack.c.l.b16 %v321
        %v337 = vunpack.c.h.b16 %v321
        %v338 = vunpack.c.l.b16 %v322
        %v339 = vunpack.c.h.b16 %v322
        %v340 = vunpack.c.l.b16 %v323
        %v341 = vunpack.c.h.b16 %v323
        %v342 = vpack.c.b16 %v336, %v334
        %v343 = vpack.c.b16 %v337, %v335
        %v344 = vpack.c.b16 %v340, %v338
        %v345 = vpack.c.b16 %v341, %v339
        %vm350 = vcmask 261120
        %v352 = vsel %vm350, %v318, 0
        %v355 = vsel %vm350, %v319, 0
        %357 = vmatpush.bf16.msra.mxu0 0
        %358 = vmatpush.bf16.msra.mxu0 0
        %359 = vmatpush.bf16.msra.mxu0 0
        %360 = vmatpush.bf16.msra.mxu0 0
        %361 = vmatpush.bf16.msra.mxu0 0
        %362 = vmatpush.bf16.msra.mxu0 0
        %363 = vmatpush.bf16.msra.mxu0 %v344
        %364 = vmatpush.bf16.msra.mxu0 %v342
        %365 = vmatmul.bf16.gmra.mxu0 %v352
        %v366 = vpop.f32.mrf.mxu0
        %v367 = vadd.f32 %v326, %v366
        %v368 = vpop.f32.mrf.mxu0
        %v369 = vadd.f32 %v326, %v368
        %370 = vmatmul.bf16.gmra.mxu0 %v355
        %v371 = vpop.f32.mrf.mxu0
        %v372 = vadd.f32 %v326, %v371
        %v373 = vpop.f32.mrf.mxu0
        %v374 = vadd.f32 %v326, %v373
        %375 = vdwg.mxu0
        %376 = vmatpush.bf16.msra.mxu0 0
        %377 = vmatpush.bf16.msra.mxu0 0
        %378 = vmatpush.bf16.msra.mxu0 0
        %379 = vmatpush.bf16.msra.mxu0 0
        %380 = vmatpush.bf16.msra.mxu0 0
        %381 = vmatpush.bf16.msra.mxu0 0
        %382 = vmatpush.bf16.msra.mxu0 %v345
        %383 = vmatpush.bf16.msra.mxu0 %v343
        %384 = vmatmul.bf16.gmra.mxu0 %v352
        %v385 = vpop.f32.mrf.mxu0
        %v386 = vadd.f32 %v327, %v385
        %v387 = vpop.f32.mrf.mxu0
        %v388 = vadd.f32 %v327, %v387
        %389 = vmatmul.bf16.gmra.mxu0 %v355
        %v390 = vpop.f32.mrf.mxu0
        %v391 = vadd.f32 %v327, %v390
        %v392 = vpop.f32.mrf.mxu0
        %v393 = vadd.f32 %v327, %v392
        %394 = vdwg.mxu0
        %v395 = vmax.f32 %v367, 0.0
        %v396 = vmax.f32 %v386, 0.0
        %v397 = vmax.f32 %v369, 0.0
        %v398 = vmax.f32 %v388, 0.0
        %v399 = vmax.f32 %v372, 0.0
        %v400 = vmax.f32 %v391, 0.0
        %v401 = vmax.f32 %v374, 0.0
        %v402 = vmax.f32 %v393, 0.0
        %v403 = vpack.c.bf16 %v397, %v395
        %v404 = vpack.c.bf16 %v398, %v396
        %v405 = vpack.c.bf16 %v401, %v399
        %v406 = vpack.c.bf16 %v402, %v400
        %v407 = vld [vmem:[#allocation2] sm:$0xff]
        %v408 = vld [vmem:[#allocation2 + $0x8] sm:$0xff]
        %v409 = vld [vmem:[#allocation2 + $0x10] sm:$0xff]
        %v410 = vld [vmem:[#allocation2 + $0x18] sm:$0xff]
        %v411 = vld [vmem:[#allocation3] sm:$0xf]
        %v412 = vld [vmem:[#allocation3 + $0x4] sm:$0xf]
        %v413 = vld [vmem:[#allocation3 + $0x8] sm:$0xf]
        %v414 = vld [vmem:[#allocation3 + $0xc] sm:$0xf]
        %v415 = vld [vmem:[#allocation3 + $0x10] sm:$0xf]
        %v416 = vld [vmem:[#allocation3 + $0x14] sm:$0xf]
        %v417 = vld [vmem:[#allocation3 + $0x18] sm:$0xf]
        %v418 = vld [vmem:[#allocation3 + $0x1c] sm:$0xf]
        %v419 = vld [vmem:[#allocation3 + $0x20] sm:$0xf]
        %v420 = vld [vmem:[#allocation3 + $0x24] sm:$0xf]
        %v421 = vld [vmem:[#allocation3 + $0x28] sm:$0xf]
        %v422 = vld [vmem:[#allocation3 + $0x2c] sm:$0xf]
        %v423 = vld [vmem:[#allocation3 + $0x30] sm:$0xf]
        %v424 = vld [vmem:[#allocation3 + $0x34] sm:$0xf]
        %v425 = vld [vmem:[#allocation3 + $0x38] sm:$0xf]
        %v426 = vld [vmem:[#allocation3 + $0x3c] sm:$0xf]
        %v427 = vld [vmem:[#allocation3 + $0x40] sm:$0xf]
        %v428 = vld [vmem:[#allocation3 + $0x44] sm:$0xf]
        %v429 = vld [vmem:[#allocation3 + $0x48] sm:$0xf]
        %v430 = vld [vmem:[#allocation3 + $0x4c] sm:$0xf]
        %v431 = vld [vmem:[#allocation3 + $0x50] sm:$0xf]
        %v432 = vld [vmem:[#allocation3 + $0x54] sm:$0xf]
        %v433 = vld [vmem:[#allocation3 + $0x58] sm:$0xf]
        %v434 = vld [vmem:[#allocation3 + $0x5c] sm:$0xf]
        %v435 = vld [vmem:[#allocation3 + $0x60] sm:$0xf]
        %v436 = vld [vmem:[#allocation3 + $0x64] sm:$0xf]
        %v437 = vld [vmem:[#allocation3 + $0x68] sm:$0xf]
        %v438 = vld [vmem:[#allocation3 + $0x6c] sm:$0xf]
        %v439 = vld [vmem:[#allocation3 + $0x70] sm:$0xf]
        %v440 = vld [vmem:[#allocation3 + $0x74] sm:$0xf]
        %v441 = vld [vmem:[#allocation3 + $0x78] sm:$0xf]
        %v442 = vld [vmem:[#allocation3 + $0x7c] sm:$0xf]
        %v475 = vunpack.c.l.b16 %v411
        %v476 = vunpack.c.l.b16 %v412
        %v477 = vunpack.c.l.b16 %v413
        %v478 = vunpack.c.l.b16 %v414
        %v479 = vunpack.c.l.b16 %v415
        %v480 = vunpack.c.l.b16 %v416
        %v481 = vunpack.c.l.b16 %v417
        %v482 = vunpack.c.l.b16 %v418
        %v483 = vunpack.c.l.b16 %v419
        %v484 = vunpack.c.l.b16 %v420
        %v485 = vunpack.c.l.b16 %v421
        %v486 = vunpack.c.l.b16 %v422
        %v487 = vunpack.c.l.b16 %v423
        %v488 = vunpack.c.l.b16 %v424
        %v489 = vunpack.c.l.b16 %v425
        %v490 = vunpack.c.l.b16 %v426
        %v491 = vunpack.c.l.b16 %v427
        %v492 = vunpack.c.l.b16 %v428
        %v493 = vunpack.c.l.b16 %v429
        %v494 = vunpack.c.l.b16 %v430
        %v495 = vunpack.c.l.b16 %v431
        %v496 = vunpack.c.l.b16 %v432
        %v497 = vunpack.c.l.b16 %v433
        %v498 = vunpack.c.l.b16 %v434
        %v499 = vunpack.c.l.b16 %v435
        %v500 = vunpack.c.l.b16 %v436
        %v501 = vunpack.c.l.b16 %v437
        %v502 = vunpack.c.l.b16 %v438
        %v503 = vunpack.c.l.b16 %v439
        %v504 = vunpack.c.l.b16 %v440
        %v505 = vunpack.c.l.b16 %v441
        %v506 = vunpack.c.l.b16 %v442
        %v507 = vpack.c.b16 %v476, %v475
        %v508 = vpack.c.b16 %v478, %v477
        %v509 = vpack.c.b16 %v480, %v479
        %v510 = vpack.c.b16 %v482, %v481
        %v511 = vpack.c.b16 %v484, %v483
        %v512 = vpack.c.b16 %v486, %v485
        %v513 = vpack.c.b16 %v488, %v487
        %v514 = vpack.c.b16 %v490, %v489
        %v515 = vpack.c.b16 %v492, %v491
        %v516 = vpack.c.b16 %v494, %v493
        %v517 = vpack.c.b16 %v496, %v495
        %v518 = vpack.c.b16 %v498, %v497
        %v519 = vpack.c.b16 %v500, %v499
        %v520 = vpack.c.b16 %v502, %v501
        %v521 = vpack.c.b16 %v504, %v503
        %v522 = vpack.c.b16 %v506, %v505
        %539 = vmatpush.bf16.msra.mxu0 %v514
        %540 = vmatpush.bf16.msra.mxu0 %v513
        %541 = vmatpush.bf16.msra.mxu0 %v512
        %542 = vmatpush.bf16.msra.mxu0 %v511
        %543 = vmatpush.bf16.msra.mxu0 %v510
        %544 = vmatpush.bf16.msra.mxu0 %v509
        %545 = vmatpush.bf16.msra.mxu0 %v508
        %546 = vmatpush.bf16.msra.mxu0 %v507
        %547 = vmatmul.bf16.gmra.mxu0 %v403
        %v548 = vpop.f32.mrf.mxu0
        %v549 = vadd.f32 0.0, %v548
        %v550 = vpop.f32.mrf.mxu0
        %v551 = vadd.f32 0.0, %v550
        %552 = vmatmul.bf16.gmra.mxu0 %v405
        %v553 = vpop.f32.mrf.mxu0
        %v554 = vadd.f32 0.0, %v553
        %v555 = vpop.f32.mrf.mxu0
        %v556 = vadd.f32 0.0, %v555
        %557 = vdwg.mxu0
        %558 = vmatpush.bf16.msra.mxu0 %v522
        %559 = vmatpush.bf16.msra.mxu0 %v521
        %560 = vmatpush.bf16.msra.mxu0 %v520
        %561 = vmatpush.bf16.msra.mxu0 %v519
        %562 = vmatpush.bf16.msra.mxu0 %v518
        %563 = vmatpush.bf16.msra.mxu0 %v517
        %564 = vmatpush.bf16.msra.mxu0 %v516
        %565 = vmatpush.bf16.msra.mxu0 %v515
        %566 = vmatmul.bf16.gmra.mxu0 %v404
        %v567 = vpop.f32.mrf.mxu0
        %v568 = vadd.f32 %v549, %v567
        %v569 = vpop.f32.mrf.mxu0
        %v570 = vadd.f32 %v551, %v569
        %571 = vmatmul.bf16.gmra.mxu0 %v406
        %v572 = vpop.f32.mrf.mxu0
        %v573 = vadd.f32 %v554, %v572
        %v574 = vpop.f32.mrf.mxu0
        %v575 = vadd.f32 %v556, %v574
        %576 = vdwg.mxu0
        %v577 = vadd.f32 %v407, %v568
        %v578 = vadd.f32 %v408, %v570
        %v579 = vadd.f32 %v409, %v573
        %v580 = vadd.f32 %v410, %v575
        %581 = vst [vmem:[#allocation2] sm:$0xff] %v577
        %582 = vst [vmem:[#allocation2 + $0x8] sm:$0xff] %v578
        %583 = vst [vmem:[#allocation2 + $0x10] sm:$0xff] %v579
        %584 = vst [vmem:[#allocation2 + $0x18] sm:$0xff] %v580
        // Predicated region
        $region49: #{tpu_custom_call.1} parent=39 // pred_check
          %p585 = pneg %p306
        $region50: #{tpu_custom_call.1} parent=39 // pred_check_branch
          %587 = sbr.rel (%p585) target = $region52
        $region51: #{tpu_custom_call.1} parent=39 // pred_region
          %v588 = vld [vmem:[#allocation2] sm:$0xff]
          %v589 = vld [vmem:[#allocation2 + $0x8] sm:$0xff]
          %v590 = vld [vmem:[#allocation2 + $0x10] sm:$0xff]
          %v591 = vld [vmem:[#allocation2 + $0x18] sm:$0xff]
          %v592 = vld [vmem:[%s4] sm:$0x1]
          %v594 = vperm.slane %v592, 0
          %v596 = vadd.f32 %v588, %v594
          %v597 = vadd.f32 %v589, %v594
          %v598 = vadd.f32 %v590, %v594
          %v599 = vadd.f32 %v591, %v594
          %600 = vst [vmem:[%s285] sm:$0xff] %v596
          %601 = vst [vmem:[%s285 + $0x8] sm:$0xff] %v597
          %602 = vst [vmem:[%s285 + $0x10] sm:$0xff] %v598
          %603 = vst [vmem:[%s285 + $0x18] sm:$0xff] %v599
        $region52: #{tpu_custom_call.1} parent=39 // pred_fallthru
          _
        %s604 = sand.u32 %s165, 1
        %s605 = scalar_lea.sflag [#allocation5], %s604
        %s606 = sand.u32 %s165, 1
        %s607 = smul.addr %s606, 32
        %s608 = scalar_lea.vmem [#allocation6], %s607
        // Predicated region
        $region53: #{tpu_custom_call.1} parent=39 // pred_check
          %p609 = pneg %p175
        $region54: #{tpu_custom_call.1} parent=39 // pred_check_branch
          %611 = sbr.rel (%p609) target = $region56
        $region55: #{tpu_custom_call.1} parent=39 // pred_region
          %s612 = smul.u32 4, %s24
          %614 = vsyncadd %s605, 0
          %s615 = smul.addr %s612, 8
          %s616 = scalar_lea.hbm %s5, %s615
          %s617 = sshll.u32 %s608, 4
          %s618 = int_to_ptr.vmem [resolvable:$true] %s617
          %s619 = sshll.u32 %s616, 4
          %s620 = int_to_ptr.hbm [resolvable:$true] %s619
          %625 = dma.vmem_to_hbm [thread:$0]  %s618, 512, %s620, %s605, 128, 128, 8
        $region56: #{tpu_custom_call.1} parent=39 // pred_fallthru
          _
      $region40: #{tpu_custom_call.1} parent=5 // pred_fallthru
        _
      %p626 = scmp.le.s32.totalorder 2, %s15
      // Predicated region
      $region57: #{tpu_custom_call.1} parent=5 // pred_check
        %p627 = pneg %p626
      $region58: #{tpu_custom_call.1} parent=5 // pred_check_branch
        %629 = sbr.rel (%p627) target = $region60
      $region59: #{tpu_custom_call.1} parent=5 // pred_region
        %s630 = ssub.s32 %s15, 2
        // Predicated region
        $region61: #{tpu_custom_call.1} parent=59 // pred_check
          %p631 = pneg %p181
        $region62: #{tpu_custom_call.1} parent=59 // pred_check_branch
          %633 = sbr.rel (%p631) target = $region64
        $region63: #{tpu_custom_call.1} parent=59 // pred_region
          %s634 = sand.u32 %s166, 1
          %s635 = scalar_lea.sflag [#allocation5], %s634
          %s636 = sand.u32 %s166, 1
          %s637 = smul.addr %s636, 32
          %s638 = scalar_lea.vmem [#allocation6], %s637
          %640 = dma.done %s635, 512
        $region64: #{tpu_custom_call.1} parent=59 // pred_fallthru
          _
      $region60: #{tpu_custom_call.1} parent=5 // pred_fallthru
        _
    $region6: #{tpu_custom_call.1} parent=1 // loop_footer
      %s19 = sadd.s32 1, %s15
    $region7: #{tpu_custom_call.1} parent=1 // loop_footer_branch
      %14 = sbr.rel target = $region3
    $region8: #{tpu_custom_call.1} parent=1 // loop_exit
      _
    %641 = vsyncpa [#allocation4], 1
    %s642 = scalar_lea.sflag [#allocation4], 1
    %643 = vsyncpa %s642, 1
    %644 = vsyncpa [#allocation5], 1
    %s645 = scalar_lea.sflag [#allocation5], 1
    %646 = vsyncpa %s645, 1

</llo_original>
